<compile_context>
chip_gen: v6e
topology: v6e:2x2x1
jax: 0.10.0
libtpu: 0.0.40
codegen_flags: <defaults>
</compile_context>

<pallas_src>
import functools

import jax
import jax.numpy as jnp
from jax import lax
from jax.experimental import pallas as pl
from jax.experimental.pallas import tpu as pltpu

_LANES = 128
_ABS_MASK = 0x7FFFFFFF          # clears the sign bit of an f32 bit pattern
_SIGN_FLIP = -(1 << 31)         # 0x80000000 as an int32


def _topk_prune_kernel(sp_ref, x_ref, o_ref, stash_ref, thr_ref, *, tr, num_tiles):
    """Fused stream -> radix-select -> apply kernel (grid = 2 * num_tiles)."""
    i = pl.program_id(0)
    sign_flip = jnp.int32(_SIGN_FLIP)

    # ---- Phase 1: stream x, stash order-preserving int32 keys in VMEM ----
    @pl.when(i < num_tiles)
    def _stream():
        u = pltpu.bitcast(x_ref[...], jnp.int32)
        sign = jnp.bitwise_and(jnp.right_shift(u, 31), jnp.int32(1))
        # key = rotl(bits, 1) ^ 0x80000000 : signed '>=' on keys == '>=' on |x|
        s = jnp.bitwise_xor(jnp.bitwise_or(jnp.left_shift(u, 1), sign), sign_flip)
        if num_tiles == 1:
            stash_ref[...] = s
        else:
            stash_ref[pl.ds(pl.multiple_of(i * tr, tr), tr), :] = s

    # ---- Threshold select: exact 31-bit radix refinement over the stash ----
    @pl.when(i == num_tiles - 1)
    def _select():
        kk = sp_ref[0]

        def count_ge(cand):
            # count of elements with |x| bit pattern >= cand (cand >= 1)
            cand2 = jnp.bitwise_xor(jnp.left_shift(cand, 1), sign_flip)
            if num_tiles == 1:
                return jnp.sum((stash_ref[...] >= cand2).astype(jnp.int32))

            def chunk(off):
                blk = stash_ref[pl.ds(off, tr), :]
                # leading-axis sum -> (1,128) vector partial (VALU adds, no
                # scalar carry); single cross-lane reduce per bit below.
                return jnp.sum((blk >= cand2).astype(jnp.int32),
                               axis=0, keepdims=True)

            if num_tiles <= 8:
                acc = chunk(0)
                for c in range(1, num_tiles):
                    acc = acc + chunk(c * tr)
            else:
                acc = lax.fori_loop(
                    1, num_tiles,
                    lambda c, a: a + chunk(pl.multiple_of(c * tr, tr)),
                    chunk(0), unroll=4)
            return jnp.sum(acc)

        thr = jnp.int32(0)
        for b in range(30, -1, -1):
            cand = jnp.bitwise_or(thr, jnp.int32(1 << b))
            thr = jnp.where(count_ge(cand) >= kk, cand, thr)
        # store the threshold already mapped into key space
        thr_ref[0] = jnp.bitwise_xor(jnp.left_shift(thr, 1), sign_flip)

    # ---- Phase 2: decode x from the stash, apply threshold, write output ----
    @pl.when(i >= num_tiles)
    def _apply():
        j = i - num_tiles
        if num_tiles == 1:
            s = stash_ref[...]
        else:
            s = stash_ref[pl.ds(pl.multiple_of(j * tr, tr), tr), :]
        t = jnp.bitwise_xor(s, sign_flip)
        u = jnp.bitwise_or(
            jnp.bitwise_and(jnp.right_shift(t, 1), jnp.int32(_ABS_MASK)),
            jnp.left_shift(t, 31))
        xv = pltpu.bitcast(u, jnp.float32)
        o_ref[...] = jnp.where(s >= thr_ref[0], xv, jnp.zeros_like(xv))


def _vmem_capacity_bytes() -> int:
    try:
        cap = getattr(pltpu.get_tpu_info(), "vmem_capacity_bytes", None)
        if cap:
            return int(cap)
    except Exception:
        pass
    return 64 << 20  # conservative: v7x per-TensorCore VMEM


def _jax_fallback_topk(x: jax.Array, k: int) -> jax.Array:
    # TODO(synk): replace with a multi-sweep Pallas variant (HBM-resident stash).
    shape = x.shape
    flat = x.reshape(-1)
    _, idx = lax.top_k(jnp.abs(flat), k)
    mask = jnp.zeros(flat.shape, flat.dtype).at[idx].set(jnp.asarray(1, flat.dtype))
    return (flat * mask).reshape(shape)


def topk_layer_forward(x: jax.Array, ratio: float, *, tile_rows: int = 512) -> jax.Array:
    """Pallas implementation of TopkLayer.forward (forward pass only)."""
    shape = x.shape
    orig_dtype = x.dtype
    n = int(x.size)
    if n == 0:
        return x
    k = int(ratio * n)
    if k <= 0:
        return jnp.zeros(shape, orig_dtype)
    if k >= n:
        return x

    flat = x.reshape(-1)
    if flat.dtype != jnp.float32:
        flat = flat.astype(jnp.float32)

    rows_raw = pl.cdiv(n, _LANES)
    if rows_raw <= tile_rows:
        num_tiles = 1
        tr = rows_raw
    else:
        num_tiles = pl.cdiv(rows_raw, tile_rows)
        tr = ((pl.cdiv(rows_raw, num_tiles) + 7) // 8) * 8   # sublane aligned
    rows = num_tiles * tr
    padded = rows * _LANES

    # VMEM budget: key stash + double-buffered in/out pipeline blocks + margin.
    stash_bytes = rows * _LANES * 4
    pipe_bytes = 4 * tr * _LANES * 4
    need = stash_bytes + pipe_bytes + (2 << 20)
    cap = _vmem_capacity_bytes()
    if need > cap - (8 << 20):
        return _jax_fallback_topk(x, k).astype(orig_dtype)
    vmem_limit = int(min(max(need + (4 << 20), 32 << 20), cap - (2 << 20)))

    if padded != n:
        # zero padding never enters the top-k (|0| keys are never counted)
        flat = jnp.pad(flat, (0, padded - n))
    x2d = flat.reshape(rows, _LANES)

    sp = jnp.array([k], dtype=jnp.int32)
    out2d = pl.pallas_call(
        functools.partial(_topk_prune_kernel, tr=tr, num_tiles=num_tiles),
        out_shape=jax.ShapeDtypeStruct((rows, _LANES), jnp.float32),
        grid_spec=pltpu.PrefetchScalarGridSpec(
            num_scalar_prefetch=1,
            grid=(2 * num_tiles,),
            in_specs=[pl.BlockSpec(
                (tr, _LANES),
                lambda i, kref: (jnp.minimum(i, num_tiles - 1), 0))],
            out_specs=pl.BlockSpec(
                (tr, _LANES),
                lambda i, kref: (jnp.maximum(i - num_tiles, 0), 0)),
            scratch_shapes=[
                pltpu.VMEM((rows, _LANES), jnp.int32),   # key stash
                pltpu.SMEM((1,), jnp.int32),             # selected threshold key
            ],
        ),
        compiler_params=pltpu.CompilerParams(
            dimension_semantics=("arbitrary",),
            vmem_limit_bytes=vmem_limit,
        ),
    )(sp, x2d)

    out_flat = out2d.reshape(-1)
    if padded != n:
        out_flat = out_flat[:n]
    out = out_flat.reshape(shape)
    if out.dtype != orig_dtype:
        out = out.astype(orig_dtype)
    return out


class TopkLayer:
    """Mirror of the PyTorch module's constructor signature (shape is unused)."""

    def __init__(self, compress_ratio: float, shape=None):
        self.ratio = compress_ratio

    def __call__(self, x):
        return topk_layer_forward(x, self.ratio)


def _reference_topk(x: jax.Array, ratio: float) -> jax.Array:
    """Pure-JAX reference matching TopkPruning.forward (index tie-breaking)."""
    shape = x.shape
    flat = x.reshape(-1)
    k = int(ratio * flat.shape[0])
    if k <= 0:
        return jnp.zeros(shape, flat.dtype)
    _, idx = lax.top_k(jnp.abs(flat), k)
    mask = jnp.zeros_like(flat).at[idx].set(1.0)
    return (flat * mask).reshape(shape)


if __name__ == "__main__":
    key = jax.random.PRNGKey(0)
    k1, k2, k3 = jax.random.split(key, 3)

    # Case 1: NCHW activation (numel multiple of 128), single-tile path.
    x1 = jax.random.normal(k1, (2, 4, 16, 16), dtype=jnp.float32)
    layer = TopkLayer(0.1, x1.shape)
    out1 = jax.block_until_ready(layer(x1))
    ref1 = jax.block_until_ready(_reference_topk(x1, 0.1))
    assert out1.shape == x1.shape and out1.dtype == x1.dtype
    assert jnp.array_equal(out1, ref1), "mismatch vs reference top-k pruning (case 1)"

    # Case 2: ragged numel (not a multiple of 128): exercises the padded path.
    x2 = jax.random.normal(k2, (3, 5, 7, 11), dtype=jnp.float32)
    out2 = jax.block_until_ready(topk_layer_forward(x2, 0.3))
    ref2 = jax.block_until_ready(_reference_topk(x2, 0.3))
    assert jnp.array_equal(out2, ref2), "mismatch vs reference top-k pruning (case 2)"

    # Case 3: multi-tile path (rows > tile_rows); tie-tolerant threshold check.
    x3 = jax.random.normal(k3, (2, 64, 32, 32), dtype=jnp.float32)
    ratio3 = 0.25
    out3 = jax.block_until_ready(topk_layer_forward(x3, ratio3))
    kk3 = int(ratio3 * x3.size)
    thr_val = lax.top_k(jnp.abs(x3.reshape(-1)), kk3)[0][-1]
    exp3 = jnp.where(jnp.abs(x3) >= thr_val, x3, jnp.zeros_like(x3))
    assert jnp.array_equal(out3, exp3), "mismatch vs threshold reference (case 3)"

    print("KERNEL_OK")
</pallas_src>

<mosaic_0001>
module attributes {stable_mosaic.version = 11 : i64} {
  func.func @_topk_prune_kernel(%arg0: i32, %arg1: memref<1xi32, #tpu.memory_space<smem>>, %arg2: memref<16x128xf32, #tpu.memory_space<vmem>>, %arg3: memref<16x128xf32, #tpu.memory_space<vmem>>, %arg4: memref<16x128xi32, #tpu.memory_space<vmem>>, %arg5: memref<1xi32, #tpu.memory_space<smem>>) attributes {dimension_semantics = [#tpu.dimension_semantics<arbitrary>], iteration_bounds = array<i64: 2>, scalar_prefetch = 1 : i64, scratch_operands = 2 : i64, tpu.core_type = #tpu.core_type<tc>, window_params = [{transform_indices = @transform_0, window_bounds = array<i64: 16, 128>}, {transform_indices = @transform_1, window_bounds = array<i64: 16, 128>}]} {
    %c1_i32 = arith.constant 1 : i32
    %0 = arith.cmpi slt, %arg0, %c1_i32 : i32
    %1 = arith.extui %0 : i1 to i32
    %c-2147483648_i32 = arith.constant -2147483648 : i32
    %c0_i32 = arith.constant 0 : i32
    %2 = arith.cmpi ne, %1, %c0_i32 : i32
    scf.if %2 {
      %c0 = arith.constant 0 : index
      %c0_6 = arith.constant 0 : index
      %9 = vector.load %arg2[%c0, %c0_6] : memref<16x128xf32, #tpu.memory_space<vmem>>, vector<16x128xf32>
      %10 = tpu.bitcast %9 : vector<16x128xf32> -> vector<16x128xi32>
      %c31_i32 = arith.constant 31 : i32
      %11 = vector.broadcast %c31_i32 : i32 to vector<16x128xi32>
      %12 = arith.shrsi %10, %11 : vector<16x128xi32>
      %c1_i32_7 = arith.constant 1 : i32
      %13 = vector.broadcast %c1_i32_7 : i32 to vector<16x128xi32>
      %14 = arith.andi %12, %13 : vector<16x128xi32>
      %c1_i32_8 = arith.constant 1 : i32
      %15 = vector.broadcast %c1_i32_8 : i32 to vector<16x128xi32>
      %16 = arith.shli %10, %15 : vector<16x128xi32>
      %17 = arith.ori %16, %14 : vector<16x128xi32>
      %18 = vector.broadcast %c-2147483648_i32 : i32 to vector<16x128xi32>
      %19 = arith.xori %17, %18 : vector<16x128xi32>
      %c0_9 = arith.constant 0 : index
      %c0_10 = arith.constant 0 : index
      %20 = vector.load %arg4[%c0_9, %c0_10] : memref<16x128xi32, #tpu.memory_space<vmem>>, vector<16x128xi32>
      tpu.vector_store %arg4[%c0_9, %c0_10], %19 {strides = array<i32>} : memref<16x128xi32, #tpu.memory_space<vmem>>, vector<16x128xi32>,
    } else {
    }
    %c0_i32_0 = arith.constant 0 : i32
    %3 = arith.cmpi eq, %arg0, %c0_i32_0 : i32
    %4 = arith.extui %3 : i1 to i32
    %c-2147483648_i32_1 = arith.constant -2147483648 : i32
    %c0_i32_2 = arith.constant 0 : i32
    %5 = arith.cmpi ne, %4, %c0_i32_2 : i32
    scf.if %5 {
      %c0 = arith.constant 0 : index
      %9 = memref.load %arg1[%c0] : memref<1xi32, #tpu.memory_space<smem>>
      %c0_i32_6 = arith.constant 0 : i32
      %c1073741824_i32 = arith.constant 1073741824 : i32
      %10 = arith.ori %c0_i32_6, %c1073741824_i32 : i32
      %c1_i32_7 = arith.constant 1 : i32
      %11 = arith.shli %10, %c1_i32_7 : i32
      %12 = arith.xori %11, %c-2147483648_i32_1 : i32
      %c0_8 = arith.constant 0 : index
      %c0_9 = arith.constant 0 : index
      %13 = vector.load %arg4[%c0_8, %c0_9] : memref<16x128xi32, #tpu.memory_space<vmem>>, vector<16x128xi32>
      %14 = vector.broadcast %12 : i32 to vector<16x128xi32>
      %15 = arith.cmpi sge, %13, %14 : vector<16x128xi32>
      %16 = arith.extui %15 : vector<16x128xi1> to vector<16x128xi32>
      %17 = vector.shape_cast %16 : vector<16x128xi32> to vector<1x16x128xi32>
      %cst = arith.constant dense<0> : vector<1xi32>
      %18 = vector.multi_reduction <add>, %17, %cst [1, 2] : vector<1x16x128xi32> to vector<1xi32>
      %19 = vector.shape_cast %18 : vector<1xi32> to vector<1x1x1xi32>
      %20 = vector.extract %19[0, 0, 0] : i32 from vector<1x1x1xi32>
      %21 = arith.cmpi sge, %20, %9 : i32
      %c0_i32_10 = arith.constant 0 : i32
      %22 = arith.select %21, %10, %c0_i32_10 : i32
      %c536870912_i32 = arith.constant 536870912 : i32
      %23 = arith.ori %22, %c536870912_i32 : i32
      %c1_i32_11 = arith.constant 1 : i32
      %24 = arith.shli %23, %c1_i32_11 : i32
      %25 = arith.xori %24, %c-2147483648_i32_1 : i32
      %c0_12 = arith.constant 0 : index
      %c0_13 = arith.constant 0 : index
      %26 = vector.load %arg4[%c0_12, %c0_13] : memref<16x128xi32, #tpu.memory_space<vmem>>, vector<16x128xi32>
      %27 = vector.broadcast %25 : i32 to vector<16x128xi32>
      %28 = arith.cmpi sge, %26, %27 : vector<16x128xi32>
      %29 = arith.extui %28 : vector<16x128xi1> to vector<16x128xi32>
      %30 = vector.shape_cast %29 : vector<16x128xi32> to vector<1x16x128xi32>
      %cst_14 = arith.constant dense<0> : vector<1xi32>
      %31 = vector.multi_reduction <add>, %30, %cst_14 [1, 2] : vector<1x16x128xi32> to vector<1xi32>
      %32 = vector.shape_cast %31 : vector<1xi32> to vector<1x1x1xi32>
      %33 = vector.extract %32[0, 0, 0] : i32 from vector<1x1x1xi32>
      %34 = arith.cmpi sge, %33, %9 : i32
      %35 = arith.select %34, %23, %22 : i32
      %c268435456_i32 = arith.constant 268435456 : i32
      %36 = arith.ori %35, %c268435456_i32 : i32
      %c1_i32_15 = arith.constant 1 : i32
      %37 = arith.shli %36, %c1_i32_15 : i32
      %38 = arith.xori %37, %c-2147483648_i32_1 : i32
      %c0_16 = arith.constant 0 : index
      %c0_17 = arith.constant 0 : index
      %39 = vector.load %arg4[%c0_16, %c0_17] : memref<16x128xi32, #tpu.memory_space<vmem>>, vector<16x128xi32>
      %40 = vector.broadcast %38 : i32 to vector<16x128xi32>
      %41 = arith.cmpi sge, %39, %40 : vector<16x128xi32>
      %42 = arith.extui %41 : vector<16x128xi1> to vector<16x128xi32>
      %43 = vector.shape_cast %42 : vector<16x128xi32> to vector<1x16x128xi32>
      %cst_18 = arith.constant dense<0> : vector<1xi32>
      %44 = vector.multi_reduction <add>, %43, %cst_18 [1, 2] : vector<1x16x128xi32> to vector<1xi32>
      %45 = vector.shape_cast %44 : vector<1xi32> to vector<1x1x1xi32>
      %46 = vector.extract %45[0, 0, 0] : i32 from vector<1x1x1xi32>
      %47 = arith.cmpi sge, %46, %9 : i32
      %48 = arith.select %47, %36, %35 : i32
      %c134217728_i32 = arith.constant 134217728 : i32
      %49 = arith.ori %48, %c134217728_i32 : i32
      %c1_i32_19 = arith.constant 1 : i32
      %50 = arith.shli %49, %c1_i32_19 : i32
      %51 = arith.xori %50, %c-2147483648_i32_1 : i32
      %c0_20 = arith.constant 0 : index
      %c0_21 = arith.constant 0 : index
      %52 = vector.load %arg4[%c0_20, %c0_21] : memref<16x128xi32, #tpu.memory_space<vmem>>, vector<16x128xi32>
      %53 = vector.broadcast %51 : i32 to vector<16x128xi32>
      %54 = arith.cmpi sge, %52, %53 : vector<16x128xi32>
      %55 = arith.extui %54 : vector<16x128xi1> to vector<16x128xi32>
      %56 = vector.shape_cast %55 : vector<16x128xi32> to vector<1x16x128xi32>
      %cst_22 = arith.constant dense<0> : vector<1xi32>
      %57 = vector.multi_reduction <add>, %56, %cst_22 [1, 2] : vector<1x16x128xi32> to vector<1xi32>
      %58 = vector.shape_cast %57 : vector<1xi32> to vector<1x1x1xi32>
      %59 = vector.extract %58[0, 0, 0] : i32 from vector<1x1x1xi32>
      %60 = arith.cmpi sge, %59, %9 : i32
      %61 = arith.select %60, %49, %48 : i32
      %c67108864_i32 = arith.constant 67108864 : i32
      %62 = arith.ori %61, %c67108864_i32 : i32
      %c1_i32_23 = arith.constant 1 : i32
      %63 = arith.shli %62, %c1_i32_23 : i32
      %64 = arith.xori %63, %c-2147483648_i32_1 : i32
      %c0_24 = arith.constant 0 : index
      %c0_25 = arith.constant 0 : index
      %65 = vector.load %arg4[%c0_24, %c0_25] : memref<16x128xi32, #tpu.memory_space<vmem>>, vector<16x128xi32>
      %66 = vector.broadcast %64 : i32 to vector<16x128xi32>
      %67 = arith.cmpi sge, %65, %66 : vector<16x128xi32>
      %68 = arith.extui %67 : vector<16x128xi1> to vector<16x128xi32>
      %69 = vector.shape_cast %68 : vector<16x128xi32> to vector<1x16x128xi32>
      %cst_26 = arith.constant dense<0> : vector<1xi32>
      %70 = vector.multi_reduction <add>, %69, %cst_26 [1, 2] : vector<1x16x128xi32> to vector<1xi32>
      %71 = vector.shape_cast %70 : vector<1xi32> to vector<1x1x1xi32>
      %72 = vector.extract %71[0, 0, 0] : i32 from vector<1x1x1xi32>
      %73 = arith.cmpi sge, %72, %9 : i32
      %74 = arith.select %73, %62, %61 : i32
      %c33554432_i32 = arith.constant 33554432 : i32
      %75 = arith.ori %74, %c33554432_i32 : i32
      %c1_i32_27 = arith.constant 1 : i32
      %76 = arith.shli %75, %c1_i32_27 : i32
      %77 = arith.xori %76, %c-2147483648_i32_1 : i32
      %c0_28 = arith.constant 0 : index
      %c0_29 = arith.constant 0 : index
      %78 = vector.load %arg4[%c0_28, %c0_29] : memref<16x128xi32, #tpu.memory_space<vmem>>, vector<16x128xi32>
      %79 = vector.broadcast %77 : i32 to vector<16x128xi32>
      %80 = arith.cmpi sge, %78, %79 : vector<16x128xi32>
      %81 = arith.extui %80 : vector<16x128xi1> to vector<16x128xi32>
      %82 = vector.shape_cast %81 : vector<16x128xi32> to vector<1x16x128xi32>
      %cst_30 = arith.constant dense<0> : vector<1xi32>
      %83 = vector.multi_reduction <add>, %82, %cst_30 [1, 2] : vector<1x16x128xi32> to vector<1xi32>
      %84 = vector.shape_cast %83 : vector<1xi32> to vector<1x1x1xi32>
      %85 = vector.extract %84[0, 0, 0] : i32 from vector<1x1x1xi32>
      %86 = arith.cmpi sge, %85, %9 : i32
      %87 = arith.select %86, %75, %74 : i32
      %c16777216_i32 = arith.constant 16777216 : i32
      %88 = arith.ori %87, %c16777216_i32 : i32
      %c1_i32_31 = arith.constant 1 : i32
      %89 = arith.shli %88, %c1_i32_31 : i32
      %90 = arith.xori %89, %c-2147483648_i32_1 : i32
      %c0_32 = arith.constant 0 : index
      %c0_33 = arith.constant 0 : index
      %91 = vector.load %arg4[%c0_32, %c0_33] : memref<16x128xi32, #tpu.memory_space<vmem>>, vector<16x128xi32>
      %92 = vector.broadcast %90 : i32 to vector<16x128xi32>
      %93 = arith.cmpi sge, %91, %92 : vector<16x128xi32>
      %94 = arith.extui %93 : vector<16x128xi1> to vector<16x128xi32>
      %95 = vector.shape_cast %94 : vector<16x128xi32> to vector<1x16x128xi32>
      %cst_34 = arith.constant dense<0> : vector<1xi32>
      %96 = vector.multi_reduction <add>, %95, %cst_34 [1, 2] : vector<1x16x128xi32> to vector<1xi32>
      %97 = vector.shape_cast %96 : vector<1xi32> to vector<1x1x1xi32>
      %98 = vector.extract %97[0, 0, 0] : i32 from vector<1x1x1xi32>
      %99 = arith.cmpi sge, %98, %9 : i32
      %100 = arith.select %99, %88, %87 : i32
      %c8388608_i32 = arith.constant 8388608 : i32
      %101 = arith.ori %100, %c8388608_i32 : i32
      %c1_i32_35 = arith.constant 1 : i32
      %102 = arith.shli %101, %c1_i32_35 : i32
      %103 = arith.xori %102, %c-2147483648_i32_1 : i32
      %c0_36 = arith.constant 0 : index
      %c0_37 = arith.constant 0 : index
      %104 = vector.load %arg4[%c0_36, %c0_37] : memref<16x128xi32, #tpu.memory_space<vmem>>, vector<16x128xi32>
      %105 = vector.broadcast %103 : i32 to vector<16x128xi32>
      %106 = arith.cmpi sge, %104, %105 : vector<16x128xi32>
      %107 = arith.extui %106 : vector<16x128xi1> to vector<16x128xi32>
      %108 = vector.shape_cast %107 : vector<16x128xi32> to vector<1x16x128xi32>
      %cst_38 = arith.constant dense<0> : vector<1xi32>
      %109 = vector.multi_reduction <add>, %108, %cst_38 [1, 2] : vector<1x16x128xi32> to vector<1xi32>
      %110 = vector.shape_cast %109 : vector<1xi32> to vector<1x1x1xi32>
      %111 = vector.extract %110[0, 0, 0] : i32 from vector<1x1x1xi32>
      %112 = arith.cmpi sge, %111, %9 : i32
      %113 = arith.select %112, %101, %100 : i32
      %c4194304_i32 = arith.constant 4194304 : i32
      %114 = arith.ori %113, %c4194304_i32 : i32
      %c1_i32_39 = arith.constant 1 : i32
      %115 = arith.shli %114, %c1_i32_39 : i32
      %116 = arith.xori %115, %c-2147483648_i32_1 : i32
      %c0_40 = arith.constant 0 : index
      %c0_41 = arith.constant 0 : index
      %117 = vector.load %arg4[%c0_40, %c0_41] : memref<16x128xi32, #tpu.memory_space<vmem>>, vector<16x128xi32>
      %118 = vector.broadcast %116 : i32 to vector<16x128xi32>
      %119 = arith.cmpi sge, %117, %118 : vector<16x128xi32>
      %120 = arith.extui %119 : vector<16x128xi1> to vector<16x128xi32>
      %121 = vector.shape_cast %120 : vector<16x128xi32> to vector<1x16x128xi32>
      %cst_42 = arith.constant dense<0> : vector<1xi32>
      %122 = vector.multi_reduction <add>, %121, %cst_42 [1, 2] : vector<1x16x128xi32> to vector<1xi32>
      %123 = vector.shape_cast %122 : vector<1xi32> to vector<1x1x1xi32>
      %124 = vector.extract %123[0, 0, 0] : i32 from vector<1x1x1xi32>
      %125 = arith.cmpi sge, %124, %9 : i32
      %126 = arith.select %125, %114, %113 : i32
      %c2097152_i32 = arith.constant 2097152 : i32
      %127 = arith.ori %126, %c2097152_i32 : i32
      %c1_i32_43 = arith.constant 1 : i32
      %128 = arith.shli %127, %c1_i32_43 : i32
      %129 = arith.xori %128, %c-2147483648_i32_1 : i32
      %c0_44 = arith.constant 0 : index
      %c0_45 = arith.constant 0 : index
      %130 = vector.load %arg4[%c0_44, %c0_45] : memref<16x128xi32, #tpu.memory_space<vmem>>, vector<16x128xi32>
      %131 = vector.broadcast %129 : i32 to vector<16x128xi32>
      %132 = arith.cmpi sge, %130, %131 : vector<16x128xi32>
      %133 = arith.extui %132 : vector<16x128xi1> to vector<16x128xi32>
      %134 = vector.shape_cast %133 : vector<16x128xi32> to vector<1x16x128xi32>
      %cst_46 = arith.constant dense<0> : vector<1xi32>
      %135 = vector.multi_reduction <add>, %134, %cst_46 [1, 2] : vector<1x16x128xi32> to vector<1xi32>
      %136 = vector.shape_cast %135 : vector<1xi32> to vector<1x1x1xi32>
      %137 = vector.extract %136[0, 0, 0] : i32 from vector<1x1x1xi32>
      %138 = arith.cmpi sge, %137, %9 : i32
      %139 = arith.select %138, %127, %126 : i32
      %c1048576_i32 = arith.constant 1048576 : i32
      %140 = arith.ori %139, %c1048576_i32 : i32
      %c1_i32_47 = arith.constant 1 : i32
      %141 = arith.shli %140, %c1_i32_47 : i32
      %142 = arith.xori %141, %c-2147483648_i32_1 : i32
      %c0_48 = arith.constant 0 : index
      %c0_49 = arith.constant 0 : index
      %143 = vector.load %arg4[%c0_48, %c0_49] : memref<16x128xi32, #tpu.memory_space<vmem>>, vector<16x128xi32>
      %144 = vector.broadcast %142 : i32 to vector<16x128xi32>
      %145 = arith.cmpi sge, %143, %144 : vector<16x128xi32>
      %146 = arith.extui %145 : vector<16x128xi1> to vector<16x128xi32>
      %147 = vector.shape_cast %146 : vector<16x128xi32> to vector<1x16x128xi32>
      %cst_50 = arith.constant dense<0> : vector<1xi32>
      %148 = vector.multi_reduction <add>, %147, %cst_50 [1, 2] : vector<1x16x128xi32> to vector<1xi32>
      %149 = vector.shape_cast %148 : vector<1xi32> to vector<1x1x1xi32>
      %150 = vector.extract %149[0, 0, 0] : i32 from vector<1x1x1xi32>
      %151 = arith.cmpi sge, %150, %9 : i32
      %152 = arith.select %151, %140, %139 : i32
      %c524288_i32 = arith.constant 524288 : i32
      %153 = arith.ori %152, %c524288_i32 : i32
      %c1_i32_51 = arith.constant 1 : i32
      %154 = arith.shli %153, %c1_i32_51 : i32
      %155 = arith.xori %154, %c-2147483648_i32_1 : i32
      %c0_52 = arith.constant 0 : index
      %c0_53 = arith.constant 0 : index
      %156 = vector.load %arg4[%c0_52, %c0_53] : memref<16x128xi32, #tpu.memory_space<vmem>>, vector<16x128xi32>
      %157 = vector.broadcast %155 : i32 to vector<16x128xi32>
      %158 = arith.cmpi sge, %156, %157 : vector<16x128xi32>
      %159 = arith.extui %158 : vector<16x128xi1> to vector<16x128xi32>
      %160 = vector.shape_cast %159 : vector<16x128xi32> to vector<1x16x128xi32>
      %cst_54 = arith.constant dense<0> : vector<1xi32>
      %161 = vector.multi_reduction <add>, %160, %cst_54 [1, 2] : vector<1x16x128xi32> to vector<1xi32>
      %162 = vector.shape_cast %161 : vector<1xi32> to vector<1x1x1xi32>
      %163 = vector.extract %162[0, 0, 0] : i32 from vector<1x1x1xi32>
      %164 = arith.cmpi sge, %163, %9 : i32
      %165 = arith.select %164, %153, %152 : i32
      %c262144_i32 = arith.constant 262144 : i32
      %166 = arith.ori %165, %c262144_i32 : i32
      %c1_i32_55 = arith.constant 1 : i32
      %167 = arith.shli %166, %c1_i32_55 : i32
      %168 = arith.xori %167, %c-2147483648_i32_1 : i32
      %c0_56 = arith.constant 0 : index
      %c0_57 = arith.constant 0 : index
      %169 = vector.load %arg4[%c0_56, %c0_57] : memref<16x128xi32, #tpu.memory_space<vmem>>, vector<16x128xi32>
      %170 = vector.broadcast %168 : i32 to vector<16x128xi32>
      %171 = arith.cmpi sge, %169, %170 : vector<16x128xi32>
      %172 = arith.extui %171 : vector<16x128xi1> to vector<16x128xi32>
      %173 = vector.shape_cast %172 : vector<16x128xi32> to vector<1x16x128xi32>
      %cst_58 = arith.constant dense<0> : vector<1xi32>
      %174 = vector.multi_reduction <add>, %173, %cst_58 [1, 2] : vector<1x16x128xi32> to vector<1xi32>
      %175 = vector.shape_cast %174 : vector<1xi32> to vector<1x1x1xi32>
      %176 = vector.extract %175[0, 0, 0] : i32 from vector<1x1x1xi32>
      %177 = arith.cmpi sge, %176, %9 : i32
      %178 = arith.select %177, %166, %165 : i32
      %c131072_i32 = arith.constant 131072 : i32
      %179 = arith.ori %178, %c131072_i32 : i32
      %c1_i32_59 = arith.constant 1 : i32
      %180 = arith.shli %179, %c1_i32_59 : i32
      %181 = arith.xori %180, %c-2147483648_i32_1 : i32
      %c0_60 = arith.constant 0 : index
      %c0_61 = arith.constant 0 : index
      %182 = vector.load %arg4[%c0_60, %c0_61] : memref<16x128xi32, #tpu.memory_space<vmem>>, vector<16x128xi32>
      %183 = vector.broadcast %181 : i32 to vector<16x128xi32>
      %184 = arith.cmpi sge, %182, %183 : vector<16x128xi32>
      %185 = arith.extui %184 : vector<16x128xi1> to vector<16x128xi32>
      %186 = vector.shape_cast %185 : vector<16x128xi32> to vector<1x16x128xi32>
      %cst_62 = arith.constant dense<0> : vector<1xi32>
      %187 = vector.multi_reduction <add>, %186, %cst_62 [1, 2] : vector<1x16x128xi32> to vector<1xi32>
      %188 = vector.shape_cast %187 : vector<1xi32> to vector<1x1x1xi32>
      %189 = vector.extract %188[0, 0, 0] : i32 from vector<1x1x1xi32>
      %190 = arith.cmpi sge, %189, %9 : i32
      %191 = arith.select %190, %179, %178 : i32
      %c65536_i32 = arith.constant 65536 : i32
      %192 = arith.ori %191, %c65536_i32 : i32
      %c1_i32_63 = arith.constant 1 : i32
      %193 = arith.shli %192, %c1_i32_63 : i32
      %194 = arith.xori %193, %c-2147483648_i32_1 : i32
      %c0_64 = arith.constant 0 : index
      %c0_65 = arith.constant 0 : index
      %195 = vector.load %arg4[%c0_64, %c0_65] : memref<16x128xi32, #tpu.memory_space<vmem>>, vector<16x128xi32>
      %196 = vector.broadcast %194 : i32 to vector<16x128xi32>
      %197 = arith.cmpi sge, %195, %196 : vector<16x128xi32>
      %198 = arith.extui %197 : vector<16x128xi1> to vector<16x128xi32>
      %199 = vector.shape_cast %198 : vector<16x128xi32> to vector<1x16x128xi32>
      %cst_66 = arith.constant dense<0> : vector<1xi32>
      %200 = vector.multi_reduction <add>, %199, %cst_66 [1, 2] : vector<1x16x128xi32> to vector<1xi32>
      %201 = vector.shape_cast %200 : vector<1xi32> to vector<1x1x1xi32>
      %202 = vector.extract %201[0, 0, 0] : i32 from vector<1x1x1xi32>
      %203 = arith.cmpi sge, %202, %9 : i32
      %204 = arith.select %203, %192, %191 : i32
      %c32768_i32 = arith.constant 32768 : i32
      %205 = arith.ori %204, %c32768_i32 : i32
      %c1_i32_67 = arith.constant 1 : i32
      %206 = arith.shli %205, %c1_i32_67 : i32
      %207 = arith.xori %206, %c-2147483648_i32_1 : i32
      %c0_68 = arith.constant 0 : index
      %c0_69 = arith.constant 0 : index
      %208 = vector.load %arg4[%c0_68, %c0_69] : memref<16x128xi32, #tpu.memory_space<vmem>>, vector<16x128xi32>
      %209 = vector.broadcast %207 : i32 to vector<16x128xi32>
      %210 = arith.cmpi sge, %208, %209 : vector<16x128xi32>
      %211 = arith.extui %210 : vector<16x128xi1> to vector<16x128xi32>
      %212 = vector.shape_cast %211 : vector<16x128xi32> to vector<1x16x128xi32>
      %cst_70 = arith.constant dense<0> : vector<1xi32>
      %213 = vector.multi_reduction <add>, %212, %cst_70 [1, 2] : vector<1x16x128xi32> to vector<1xi32>
      %214 = vector.shape_cast %213 : vector<1xi32> to vector<1x1x1xi32>
      %215 = vector.extract %214[0, 0, 0] : i32 from vector<1x1x1xi32>
      %216 = arith.cmpi sge, %215, %9 : i32
      %217 = arith.select %216, %205, %204 : i32
      %c16384_i32 = arith.constant 16384 : i32
      %218 = arith.ori %217, %c16384_i32 : i32
      %c1_i32_71 = arith.constant 1 : i32
      %219 = arith.shli %218, %c1_i32_71 : i32
      %220 = arith.xori %219, %c-2147483648_i32_1 : i32
      %c0_72 = arith.constant 0 : index
      %c0_73 = arith.constant 0 : index
      %221 = vector.load %arg4[%c0_72, %c0_73] : memref<16x128xi32, #tpu.memory_space<vmem>>, vector<16x128xi32>
      %222 = vector.broadcast %220 : i32 to vector<16x128xi32>
      %223 = arith.cmpi sge, %221, %222 : vector<16x128xi32>
      %224 = arith.extui %223 : vector<16x128xi1> to vector<16x128xi32>
      %225 = vector.shape_cast %224 : vector<16x128xi32> to vector<1x16x128xi32>
      %cst_74 = arith.constant dense<0> : vector<1xi32>
      %226 = vector.multi_reduction <add>, %225, %cst_74 [1, 2] : vector<1x16x128xi32> to vector<1xi32>
      %227 = vector.shape_cast %226 : vector<1xi32> to vector<1x1x1xi32>
      %228 = vector.extract %227[0, 0, 0] : i32 from vector<1x1x1xi32>
      %229 = arith.cmpi sge, %228, %9 : i32
      %230 = arith.select %229, %218, %217 : i32
      %c8192_i32 = arith.constant 8192 : i32
      %231 = arith.ori %230, %c8192_i32 : i32
      %c1_i32_75 = arith.constant 1 : i32
      %232 = arith.shli %231, %c1_i32_75 : i32
      %233 = arith.xori %232, %c-2147483648_i32_1 : i32
      %c0_76 = arith.constant 0 : index
      %c0_77 = arith.constant 0 : index
      %234 = vector.load %arg4[%c0_76, %c0_77] : memref<16x128xi32, #tpu.memory_space<vmem>>, vector<16x128xi32>
      %235 = vector.broadcast %233 : i32 to vector<16x128xi32>
      %236 = arith.cmpi sge, %234, %235 : vector<16x128xi32>
      %237 = arith.extui %236 : vector<16x128xi1> to vector<16x128xi32>
      %238 = vector.shape_cast %237 : vector<16x128xi32> to vector<1x16x128xi32>
      %cst_78 = arith.constant dense<0> : vector<1xi32>
      %239 = vector.multi_reduction <add>, %238, %cst_78 [1, 2] : vector<1x16x128xi32> to vector<1xi32>
      %240 = vector.shape_cast %239 : vector<1xi32> to vector<1x1x1xi32>
      %241 = vector.extract %240[0, 0, 0] : i32 from vector<1x1x1xi32>
      %242 = arith.cmpi sge, %241, %9 : i32
      %243 = arith.select %242, %231, %230 : i32
      %c4096_i32 = arith.constant 4096 : i32
      %244 = arith.ori %243, %c4096_i32 : i32
      %c1_i32_79 = arith.constant 1 : i32
      %245 = arith.shli %244, %c1_i32_79 : i32
      %246 = arith.xori %245, %c-2147483648_i32_1 : i32
      %c0_80 = arith.constant 0 : index
      %c0_81 = arith.constant 0 : index
      %247 = vector.load %arg4[%c0_80, %c0_81] : memref<16x128xi32, #tpu.memory_space<vmem>>, vector<16x128xi32>
      %248 = vector.broadcast %246 : i32 to vector<16x128xi32>
      %249 = arith.cmpi sge, %247, %248 : vector<16x128xi32>
      %250 = arith.extui %249 : vector<16x128xi1> to vector<16x128xi32>
      %251 = vector.shape_cast %250 : vector<16x128xi32> to vector<1x16x128xi32>
      %cst_82 = arith.constant dense<0> : vector<1xi32>
      %252 = vector.multi_reduction <add>, %251, %cst_82 [1, 2] : vector<1x16x128xi32> to vector<1xi32>
      %253 = vector.shape_cast %252 : vector<1xi32> to vector<1x1x1xi32>
      %254 = vector.extract %253[0, 0, 0] : i32 from vector<1x1x1xi32>
      %255 = arith.cmpi sge, %254, %9 : i32
      %256 = arith.select %255, %244, %243 : i32
      %c2048_i32 = arith.constant 2048 : i32
      %257 = arith.ori %256, %c2048_i32 : i32
      %c1_i32_83 = arith.constant 1 : i32
      %258 = arith.shli %257, %c1_i32_83 : i32
      %259 = arith.xori %258, %c-2147483648_i32_1 : i32
      %c0_84 = arith.constant 0 : index
      %c0_85 = arith.constant 0 : index
      %260 = vector.load %arg4[%c0_84, %c0_85] : memref<16x128xi32, #tpu.memory_space<vmem>>, vector<16x128xi32>
      %261 = vector.broadcast %259 : i32 to vector<16x128xi32>
      %262 = arith.cmpi sge, %260, %261 : vector<16x128xi32>
      %263 = arith.extui %262 : vector<16x128xi1> to vector<16x128xi32>
      %264 = vector.shape_cast %263 : vector<16x128xi32> to vector<1x16x128xi32>
      %cst_86 = arith.constant dense<0> : vector<1xi32>
      %265 = vector.multi_reduction <add>, %264, %cst_86 [1, 2] : vector<1x16x128xi32> to vector<1xi32>
      %266 = vector.shape_cast %265 : vector<1xi32> to vector<1x1x1xi32>
      %267 = vector.extract %266[0, 0, 0] : i32 from vector<1x1x1xi32>
      %268 = arith.cmpi sge, %267, %9 : i32
      %269 = arith.select %268, %257, %256 : i32
      %c1024_i32 = arith.constant 1024 : i32
      %270 = arith.ori %269, %c1024_i32 : i32
      %c1_i32_87 = arith.constant 1 : i32
      %271 = arith.shli %270, %c1_i32_87 : i32
      %272 = arith.xori %271, %c-2147483648_i32_1 : i32
      %c0_88 = arith.constant 0 : index
      %c0_89 = arith.constant 0 : index
      %273 = vector.load %arg4[%c0_88, %c0_89] : memref<16x128xi32, #tpu.memory_space<vmem>>, vector<16x128xi32>
      %274 = vector.broadcast %272 : i32 to vector<16x128xi32>
      %275 = arith.cmpi sge, %273, %274 : vector<16x128xi32>
      %276 = arith.extui %275 : vector<16x128xi1> to vector<16x128xi32>
      %277 = vector.shape_cast %276 : vector<16x128xi32> to vector<1x16x128xi32>
      %cst_90 = arith.constant dense<0> : vector<1xi32>
      %278 = vector.multi_reduction <add>, %277, %cst_90 [1, 2] : vector<1x16x128xi32> to vector<1xi32>
      %279 = vector.shape_cast %278 : vector<1xi32> to vector<1x1x1xi32>
      %280 = vector.extract %279[0, 0, 0] : i32 from vector<1x1x1xi32>
      %281 = arith.cmpi sge, %280, %9 : i32
      %282 = arith.select %281, %270, %269 : i32
      %c512_i32 = arith.constant 512 : i32
      %283 = arith.ori %282, %c512_i32 : i32
      %c1_i32_91 = arith.constant 1 : i32
      %284 = arith.shli %283, %c1_i32_91 : i32
      %285 = arith.xori %284, %c-2147483648_i32_1 : i32
      %c0_92 = arith.constant 0 : index
      %c0_93 = arith.constant 0 : index
      %286 = vector.load %arg4[%c0_92, %c0_93] : memref<16x128xi32, #tpu.memory_space<vmem>>, vector<16x128xi32>
      %287 = vector.broadcast %285 : i32 to vector<16x128xi32>
      %288 = arith.cmpi sge, %286, %287 : vector<16x128xi32>
      %289 = arith.extui %288 : vector<16x128xi1> to vector<16x128xi32>
      %290 = vector.shape_cast %289 : vector<16x128xi32> to vector<1x16x128xi32>
      %cst_94 = arith.constant dense<0> : vector<1xi32>
      %291 = vector.multi_reduction <add>, %290, %cst_94 [1, 2] : vector<1x16x128xi32> to vector<1xi32>
      %292 = vector.shape_cast %291 : vector<1xi32> to vector<1x1x1xi32>
      %293 = vector.extract %292[0, 0, 0] : i32 from vector<1x1x1xi32>
      %294 = arith.cmpi sge, %293, %9 : i32
      %295 = arith.select %294, %283, %282 : i32
      %c256_i32 = arith.constant 256 : i32
      %296 = arith.ori %295, %c256_i32 : i32
      %c1_i32_95 = arith.constant 1 : i32
      %297 = arith.shli %296, %c1_i32_95 : i32
      %298 = arith.xori %297, %c-2147483648_i32_1 : i32
      %c0_96 = arith.constant 0 : index
      %c0_97 = arith.constant 0 : index
      %299 = vector.load %arg4[%c0_96, %c0_97] : memref<16x128xi32, #tpu.memory_space<vmem>>, vector<16x128xi32>
      %300 = vector.broadcast %298 : i32 to vector<16x128xi32>
      %301 = arith.cmpi sge, %299, %300 : vector<16x128xi32>
      %302 = arith.extui %301 : vector<16x128xi1> to vector<16x128xi32>
      %303 = vector.shape_cast %302 : vector<16x128xi32> to vector<1x16x128xi32>
      %cst_98 = arith.constant dense<0> : vector<1xi32>
      %304 = vector.multi_reduction <add>, %303, %cst_98 [1, 2] : vector<1x16x128xi32> to vector<1xi32>
      %305 = vector.shape_cast %304 : vector<1xi32> to vector<1x1x1xi32>
      %306 = vector.extract %305[0, 0, 0] : i32 from vector<1x1x1xi32>
      %307 = arith.cmpi sge, %306, %9 : i32
      %308 = arith.select %307, %296, %295 : i32
      %c128_i32 = arith.constant 128 : i32
      %309 = arith.ori %308, %c128_i32 : i32
      %c1_i32_99 = arith.constant 1 : i32
      %310 = arith.shli %309, %c1_i32_99 : i32
      %311 = arith.xori %310, %c-2147483648_i32_1 : i32
      %c0_100 = arith.constant 0 : index
      %c0_101 = arith.constant 0 : index
      %312 = vector.load %arg4[%c0_100, %c0_101] : memref<16x128xi32, #tpu.memory_space<vmem>>, vector<16x128xi32>
      %313 = vector.broadcast %311 : i32 to vector<16x128xi32>
      %314 = arith.cmpi sge, %312, %313 : vector<16x128xi32>
      %315 = arith.extui %314 : vector<16x128xi1> to vector<16x128xi32>
      %316 = vector.shape_cast %315 : vector<16x128xi32> to vector<1x16x128xi32>
      %cst_102 = arith.constant dense<0> : vector<1xi32>
      %317 = vector.multi_reduction <add>, %316, %cst_102 [1, 2] : vector<1x16x128xi32> to vector<1xi32>
      %318 = vector.shape_cast %317 : vector<1xi32> to vector<1x1x1xi32>
      %319 = vector.extract %318[0, 0, 0] : i32 from vector<1x1x1xi32>
      %320 = arith.cmpi sge, %319, %9 : i32
      %321 = arith.select %320, %309, %308 : i32
      %c64_i32 = arith.constant 64 : i32
      %322 = arith.ori %321, %c64_i32 : i32
      %c1_i32_103 = arith.constant 1 : i32
      %323 = arith.shli %322, %c1_i32_103 : i32
      %324 = arith.xori %323, %c-2147483648_i32_1 : i32
      %c0_104 = arith.constant 0 : index
      %c0_105 = arith.constant 0 : index
      %325 = vector.load %arg4[%c0_104, %c0_105] : memref<16x128xi32, #tpu.memory_space<vmem>>, vector<16x128xi32>
      %326 = vector.broadcast %324 : i32 to vector<16x128xi32>
      %327 = arith.cmpi sge, %325, %326 : vector<16x128xi32>
      %328 = arith.extui %327 : vector<16x128xi1> to vector<16x128xi32>
      %329 = vector.shape_cast %328 : vector<16x128xi32> to vector<1x16x128xi32>
      %cst_106 = arith.constant dense<0> : vector<1xi32>
      %330 = vector.multi_reduction <add>, %329, %cst_106 [1, 2] : vector<1x16x128xi32> to vector<1xi32>
      %331 = vector.shape_cast %330 : vector<1xi32> to vector<1x1x1xi32>
      %332 = vector.extract %331[0, 0, 0] : i32 from vector<1x1x1xi32>
      %333 = arith.cmpi sge, %332, %9 : i32
      %334 = arith.select %333, %322, %321 : i32
      %c32_i32 = arith.constant 32 : i32
      %335 = arith.ori %334, %c32_i32 : i32
      %c1_i32_107 = arith.constant 1 : i32
      %336 = arith.shli %335, %c1_i32_107 : i32
      %337 = arith.xori %336, %c-2147483648_i32_1 : i32
      %c0_108 = arith.constant 0 : index
      %c0_109 = arith.constant 0 : index
      %338 = vector.load %arg4[%c0_108, %c0_109] : memref<16x128xi32, #tpu.memory_space<vmem>>, vector<16x128xi32>
      %339 = vector.broadcast %337 : i32 to vector<16x128xi32>
      %340 = arith.cmpi sge, %338, %339 : vector<16x128xi32>
      %341 = arith.extui %340 : vector<16x128xi1> to vector<16x128xi32>
      %342 = vector.shape_cast %341 : vector<16x128xi32> to vector<1x16x128xi32>
      %cst_110 = arith.constant dense<0> : vector<1xi32>
      %343 = vector.multi_reduction <add>, %342, %cst_110 [1, 2] : vector<1x16x128xi32> to vector<1xi32>
      %344 = vector.shape_cast %343 : vector<1xi32> to vector<1x1x1xi32>
      %345 = vector.extract %344[0, 0, 0] : i32 from vector<1x1x1xi32>
      %346 = arith.cmpi sge, %345, %9 : i32
      %347 = arith.select %346, %335, %334 : i32
      %c16_i32 = arith.constant 16 : i32
      %348 = arith.ori %347, %c16_i32 : i32
      %c1_i32_111 = arith.constant 1 : i32
      %349 = arith.shli %348, %c1_i32_111 : i32
      %350 = arith.xori %349, %c-2147483648_i32_1 : i32
      %c0_112 = arith.constant 0 : index
      %c0_113 = arith.constant 0 : index
      %351 = vector.load %arg4[%c0_112, %c0_113] : memref<16x128xi32, #tpu.memory_space<vmem>>, vector<16x128xi32>
      %352 = vector.broadcast %350 : i32 to vector<16x128xi32>
      %353 = arith.cmpi sge, %351, %352 : vector<16x128xi32>
      %354 = arith.extui %353 : vector<16x128xi1> to vector<16x128xi32>
      %355 = vector.shape_cast %354 : vector<16x128xi32> to vector<1x16x128xi32>
      %cst_114 = arith.constant dense<0> : vector<1xi32>
      %356 = vector.multi_reduction <add>, %355, %cst_114 [1, 2] : vector<1x16x128xi32> to vector<1xi32>
      %357 = vector.shape_cast %356 : vector<1xi32> to vector<1x1x1xi32>
      %358 = vector.extract %357[0, 0, 0] : i32 from vector<1x1x1xi32>
      %359 = arith.cmpi sge, %358, %9 : i32
      %360 = arith.select %359, %348, %347 : i32
      %c8_i32 = arith.constant 8 : i32
      %361 = arith.ori %360, %c8_i32 : i32
      %c1_i32_115 = arith.constant 1 : i32
      %362 = arith.shli %361, %c1_i32_115 : i32
      %363 = arith.xori %362, %c-2147483648_i32_1 : i32
      %c0_116 = arith.constant 0 : index
      %c0_117 = arith.constant 0 : index
      %364 = vector.load %arg4[%c0_116, %c0_117] : memref<16x128xi32, #tpu.memory_space<vmem>>, vector<16x128xi32>
      %365 = vector.broadcast %363 : i32 to vector<16x128xi32>
      %366 = arith.cmpi sge, %364, %365 : vector<16x128xi32>
      %367 = arith.extui %366 : vector<16x128xi1> to vector<16x128xi32>
      %368 = vector.shape_cast %367 : vector<16x128xi32> to vector<1x16x128xi32>
      %cst_118 = arith.constant dense<0> : vector<1xi32>
      %369 = vector.multi_reduction <add>, %368, %cst_118 [1, 2] : vector<1x16x128xi32> to vector<1xi32>
      %370 = vector.shape_cast %369 : vector<1xi32> to vector<1x1x1xi32>
      %371 = vector.extract %370[0, 0, 0] : i32 from vector<1x1x1xi32>
      %372 = arith.cmpi sge, %371, %9 : i32
      %373 = arith.select %372, %361, %360 : i32
      %c4_i32 = arith.constant 4 : i32
      %374 = arith.ori %373, %c4_i32 : i32
      %c1_i32_119 = arith.constant 1 : i32
      %375 = arith.shli %374, %c1_i32_119 : i32
      %376 = arith.xori %375, %c-2147483648_i32_1 : i32
      %c0_120 = arith.constant 0 : index
      %c0_121 = arith.constant 0 : index
      %377 = vector.load %arg4[%c0_120, %c0_121] : memref<16x128xi32, #tpu.memory_space<vmem>>, vector<16x128xi32>
      %378 = vector.broadcast %376 : i32 to vector<16x128xi32>
      %379 = arith.cmpi sge, %377, %378 : vector<16x128xi32>
      %380 = arith.extui %379 : vector<16x128xi1> to vector<16x128xi32>
      %381 = vector.shape_cast %380 : vector<16x128xi32> to vector<1x16x128xi32>
      %cst_122 = arith.constant dense<0> : vector<1xi32>
      %382 = vector.multi_reduction <add>, %381, %cst_122 [1, 2] : vector<1x16x128xi32> to vector<1xi32>
      %383 = vector.shape_cast %382 : vector<1xi32> to vector<1x1x1xi32>
      %384 = vector.extract %383[0, 0, 0] : i32 from vector<1x1x1xi32>
      %385 = arith.cmpi sge, %384, %9 : i32
      %386 = arith.select %385, %374, %373 : i32
      %c2_i32 = arith.constant 2 : i32
      %387 = arith.ori %386, %c2_i32 : i32
      %c1_i32_123 = arith.constant 1 : i32
      %388 = arith.shli %387, %c1_i32_123 : i32
      %389 = arith.xori %388, %c-2147483648_i32_1 : i32
      %c0_124 = arith.constant 0 : index
      %c0_125 = arith.constant 0 : index
      %390 = vector.load %arg4[%c0_124, %c0_125] : memref<16x128xi32, #tpu.memory_space<vmem>>, vector<16x128xi32>
      %391 = vector.broadcast %389 : i32 to vector<16x128xi32>
      %392 = arith.cmpi sge, %390, %391 : vector<16x128xi32>
      %393 = arith.extui %392 : vector<16x128xi1> to vector<16x128xi32>
      %394 = vector.shape_cast %393 : vector<16x128xi32> to vector<1x16x128xi32>
      %cst_126 = arith.constant dense<0> : vector<1xi32>
      %395 = vector.multi_reduction <add>, %394, %cst_126 [1, 2] : vector<1x16x128xi32> to vector<1xi32>
      %396 = vector.shape_cast %395 : vector<1xi32> to vector<1x1x1xi32>
      %397 = vector.extract %396[0, 0, 0] : i32 from vector<1x1x1xi32>
      %398 = arith.cmpi sge, %397, %9 : i32
      %399 = arith.select %398, %387, %386 : i32
      %c1_i32_127 = arith.constant 1 : i32
      %400 = arith.ori %399, %c1_i32_127 : i32
      %c1_i32_128 = arith.constant 1 : i32
      %401 = arith.shli %400, %c1_i32_128 : i32
      %402 = arith.xori %401, %c-2147483648_i32_1 : i32
      %c0_129 = arith.constant 0 : index
      %c0_130 = arith.constant 0 : index
      %403 = vector.load %arg4[%c0_129, %c0_130] : memref<16x128xi32, #tpu.memory_space<vmem>>, vector<16x128xi32>
      %404 = vector.broadcast %402 : i32 to vector<16x128xi32>
      %405 = arith.cmpi sge, %403, %404 : vector<16x128xi32>
      %406 = arith.extui %405 : vector<16x128xi1> to vector<16x128xi32>
      %407 = vector.shape_cast %406 : vector<16x128xi32> to vector<1x16x128xi32>
      %cst_131 = arith.constant dense<0> : vector<1xi32>
      %408 = vector.multi_reduction <add>, %407, %cst_131 [1, 2] : vector<1x16x128xi32> to vector<1xi32>
      %409 = vector.shape_cast %408 : vector<1xi32> to vector<1x1x1xi32>
      %410 = vector.extract %409[0, 0, 0] : i32 from vector<1x1x1xi32>
      %411 = arith.cmpi sge, %410, %9 : i32
      %412 = arith.select %411, %400, %399 : i32
      %c1_i32_132 = arith.constant 1 : i32
      %413 = arith.shli %412, %c1_i32_132 : i32
      %414 = arith.xori %413, %c-2147483648_i32_1 : i32
      %c0_133 = arith.constant 0 : index
      %415 = memref.load %arg5[%c0_133] : memref<1xi32, #tpu.memory_space<smem>>
      memref.store %414, %arg5[%c0_133] : memref<1xi32, #tpu.memory_space<smem>>
    } else {
    }
    %c1_i32_3 = arith.constant 1 : i32
    %6 = arith.cmpi sge, %arg0, %c1_i32_3 : i32
    %7 = arith.extui %6 : i1 to i32
    %c-2147483648_i32_4 = arith.constant -2147483648 : i32
    %c0_i32_5 = arith.constant 0 : i32
    %8 = arith.cmpi ne, %7, %c0_i32_5 : i32
    scf.if %8 {
      %c0 = arith.constant 0 : index
      %c0_6 = arith.constant 0 : index
      %9 = vector.load %arg4[%c0, %c0_6] : memref<16x128xi32, #tpu.memory_space<vmem>>, vector<16x128xi32>
      %10 = vector.broadcast %c-2147483648_i32_4 : i32 to vector<16x128xi32>
      %11 = arith.xori %9, %10 : vector<16x128xi32>
      %c1_i32_7 = arith.constant 1 : i32
      %12 = vector.broadcast %c1_i32_7 : i32 to vector<16x128xi32>
      %13 = arith.shrsi %11, %12 : vector<16x128xi32>
      %c2147483647_i32 = arith.constant 2147483647 : i32
      %14 = vector.broadcast %c2147483647_i32 : i32 to vector<16x128xi32>
      %15 = arith.andi %13, %14 : vector<16x128xi32>
      %c31_i32 = arith.constant 31 : i32
      %16 = vector.broadcast %c31_i32 : i32 to vector<16x128xi32>
      %17 = arith.shli %11, %16 : vector<16x128xi32>
      %18 = arith.ori %15, %17 : vector<16x128xi32>
      %19 = tpu.bitcast %18 : vector<16x128xi32> -> vector<16x128xf32>
      %c0_8 = arith.constant 0 : index
      %20 = memref.load %arg5[%c0_8] : memref<1xi32, #tpu.memory_space<smem>>
      %21 = vector.broadcast %20 : i32 to vector<16x128xi32>
      %22 = arith.cmpi sge, %9, %21 : vector<16x128xi32>
      %cst = arith.constant 0.000000e+00 : f32
      %23 = vector.broadcast %cst : f32 to vector<16x128xf32>
      %24 = arith.select %22, %19, %23 : vector<16x128xi1>, vector<16x128xf32>
      %c0_9 = arith.constant 0 : index
      %c0_10 = arith.constant 0 : index
      %25 = vector.load %arg3[%c0_9, %c0_10] : memref<16x128xf32, #tpu.memory_space<vmem>>, vector<16x128xf32>
      tpu.vector_store %arg3[%c0_9, %c0_10], %24 {strides = array<i32>} : memref<16x128xf32, #tpu.memory_space<vmem>>, vector<16x128xf32>,
    } else {
    }
    return
  }
  func.func @transform_0(%arg0: i32, %arg1: memref<1xi32, #tpu.memory_space<smem>>) -> (i32, i32) {
    %c0_i32 = arith.constant 0 : i32
    %0 = arith.minsi %arg0, %c0_i32 : i32
    %c0_i32_0 = arith.constant 0 : i32
    %c0_i32_1 = arith.constant 0 : i32
    return %0, %c0_i32_0 : i32, i32
  }
  func.func @transform_1(%arg0: i32, %arg1: memref<1xi32, #tpu.memory_space<smem>>) -> (i32, i32) {
    %c1_i32 = arith.constant 1 : i32
    %0 = arith.subi %arg0, %c1_i32 : i32
    %c0_i32 = arith.constant 0 : i32
    %1 = arith.maxsi %0, %c0_i32 : i32
    %c0_i32_0 = arith.constant 0 : i32
    %c0_i32_1 = arith.constant 0 : i32
    return %1, %c0_i32_0 : i32, i32
  }
}

</mosaic_0001>

<llo_original>
// kernel: tpu_custom_call.1
$region0: #{tpu_custom_call.1}
  #allocation0 [shape = 'u32[]', space=smem, size = 0x4, offset = 0x4, fixed_abs, tag = 'smem constant byte address 0x4 - core index']
  #allocation1 [shape = 'u32[144,128]{1,0:T(1,128)}', space=vmem, size = 0x12000, scoped, tag = 'internal scratch']
  #allocation2 [shape = 's32[16,128]{1,0:T(8,128)}', space=vmem, size = 0x2000, scoped, tag = 'scratch operand']
  #allocation3 [shape = 's32[1]{0:T(128)}', space=smem, size = 0x200, scoped, tag = 'scratch operand']
  #allocation4 [shape = 's32[1]{0}', space=sflag, size = 0x4, scoped, tag = 'scoped memory for tpu_custom_call.1']
  #allocation5 [shape = 's32[1]{0:T(128)S(6)}', space=smem, size = 0x200, scoped, tag = 'prefetched SMEM operand 0']
  %s0 = inlined_call_operand.<no memory space> [shape: s32[1], index: 0, kind: input, shape index: {}]
  %s1 = inlined_call_operand.hbm [shape: f32[16,128], index: 1, kind: input, shape index: {}]
  %s2 = inlined_call_operand.hbm [shape: f32[16,128], index: 2, kind: output, shape index: {}]
  %s3 = sld [smem:[#allocation0]]
  $region53: #{tpu_custom_call.1} parent=0
    _
  %s5 = ssub.s32 1, %s3
  %s6 = scalar_select 0, %s5, %s3
  %7 = sst [smem:[#allocation5]] %s0
  $region1: #{tpu_custom_call.1} parent=0
    #allocation6 [shape = 'u8[16384]{0}', space=vmem, size = 0x4000, scoped, tag = 'input window, operand 1']
    #allocation7 [shape = 's32[2]{0}', space=sflag, size = 0x8, scoped, tag = 'scoped memory for tpu_custom_call.1']
    #allocation8 [shape = 's32[2]{0}', space=sflag, size = 0x8, scoped, tag = 'scoped memory for tpu_custom_call.1']
    #allocation9 [shape = 'u8[16384]{0}', space=vmem, size = 0x4000, scoped, tag = 'output window, operand 0']
    %8 = vsyncpa [#allocation7], 0
    %s9 = scalar_lea.sflag [#allocation7], 1
    %10 = vsyncpa %s9, 0
    %11 = vsyncpa [#allocation8], 0
    %s12 = scalar_lea.sflag [#allocation8], 1
    %13 = vsyncpa %s12, 0
    loop: start=0, step=1, limit=4
    $region2: #{tpu_custom_call.1} parent=1 // loop_pre_header
      _
    $region3: #{tpu_custom_call.1} parent=1 // loop_header
      %s15 = sphi 0, %s19
      %p16 = scmp.ge.s32.totalorder %s15, 4
      %s29 = sphi 0, %s31
      %s32 = sphi 0, %s29
      %s33 = sphi 0, %s32
      %s49 = sphi 0, %s33
      %s61 = sphi 0, %s63
      %s64 = sphi 0, %s61
      %s65 = sphi 0, %s64
      %s81 = sphi 0, %s65
    $region4: #{tpu_custom_call.1} parent=1 // loop_header_branch
      %18 = sbr.rel (%p16) target = $region8
    $region5: #{tpu_custom_call.1} parent=1 // loop_body
      %s20 = ssub.s32 %s15, 1
      %s21 = ssub.s32 %s15, 2
      %s22 = sadd.s32 %s15, 1
      %p23 = scmp.lt.s32.totalorder %s15, 0
      %s24 = scalar_select %p23, %s15, 0
      %p25 = scmp.lt.s32.totalorder %s22, 0
      %s26 = scalar_select %p25, %s22, 0
      %s27 = ssub.s32 %s24, %s26
      %p28 = scmp.eq.s32.totalorder %s27, 0
      %s30 = sadd.s32 %s29, 1
      %s31 = scalar_select %p28, %s29, %s30
      %p34 = pneg %p28
      %p35 = scmp.eq.s32.totalorder %s15, 1
      %p36 = por %p34, %p35
      %p37 = scmp.ne.s32.totalorder %s29, %s32
      %p38 = scmp.eq.s32.totalorder %s15, 0
      %p39 = por %p37, %p38
      %p40 = scmp.ne.s32.totalorder %s29, %s32
      %p41 = scmp.eq.s32.totalorder %s20, 1
      %p42 = por %p40, %p41
      %p43 = scmp.ne.s32.totalorder %s32, %s33
      %p44 = scmp.eq.s32.totalorder %s20, 0
      %p45 = por %p43, %p44
      %p46 = scmp.ne.s32.totalorder %s32, %s33
      %p47 = scmp.eq.s32.totalorder %s21, 1
      %p48 = por %p46, %p47
      %p50 = scmp.ne.s32.totalorder %s33, %s49
      %p51 = scmp.eq.s32.totalorder %s21, 0
      %p52 = por %p50, %p51
      %s53 = ssub.s32 %s15, 1
      %p54 = scmp.gt.s32.totalorder %s53, 0
      %s55 = scalar_select %p54, %s53, 0
      %s56 = ssub.s32 %s22, 1
      %p57 = scmp.gt.s32.totalorder %s56, 0
      %s58 = scalar_select %p57, %s56, 0
      %s59 = ssub.s32 %s55, %s58
      %p60 = scmp.eq.s32.totalorder %s59, 0
      %s62 = sadd.s32 %s61, 1
      %s63 = scalar_select %p60, %s61, %s62
      %p66 = pneg %p60
      %p67 = scmp.eq.s32.totalorder %s15, 1
      %p68 = por %p66, %p67
      %p69 = scmp.ne.s32.totalorder %s61, %s64
      %p70 = scmp.eq.s32.totalorder %s15, 0
      %p71 = por %p69, %p70
      %p72 = scmp.ne.s32.totalorder %s61, %s64
      %p73 = scmp.eq.s32.totalorder %s20, 1
      %p74 = por %p72, %p73
      %p75 = scmp.ne.s32.totalorder %s64, %s65
      %p76 = scmp.eq.s32.totalorder %s20, 0
      %p77 = por %p75, %p76
      %p78 = scmp.ne.s32.totalorder %s64, %s65
      %p79 = scmp.eq.s32.totalorder %s21, 1
      %p80 = por %p78, %p79
      %p82 = scmp.ne.s32.totalorder %s65, %s81
      %p83 = scmp.eq.s32.totalorder %s21, 0
      %p84 = por %p82, %p83
      %p85 = scmp.le.s32.totalorder 1, %s15
      %p86 = scmp.lt.s32.totalorder %s15, 3
      %p87 = pnand %p85, %p86
      %p88 = pneg %p87
      // Predicated region
      $region9: #{tpu_custom_call.1} parent=5 // pred_check
        _
      $region10: #{tpu_custom_call.1} parent=5 // pred_check_branch
        %90 = sbr.rel (%p87) target = $region12
      $region11: #{tpu_custom_call.1} parent=5 // pred_region
        %s91 = ssub.s32 %s15, 1
      $region12: #{tpu_custom_call.1} parent=5 // pred_fallthru
        _
      %p92 = scmp.lt.s32.totalorder %s15, 2
      // Predicated region
      $region13: #{tpu_custom_call.1} parent=5 // pred_check
        %p93 = pneg %p92
      $region14: #{tpu_custom_call.1} parent=5 // pred_check_branch
        %95 = sbr.rel (%p93) target = $region16
      $region15: #{tpu_custom_call.1} parent=5 // pred_region
        // Predicated region
        $region17: #{tpu_custom_call.1} parent=15 // pred_check
          %p96 = pneg %p39
        $region18: #{tpu_custom_call.1} parent=15 // pred_check_branch
          %98 = sbr.rel (%p96) target = $region20
        $region19: #{tpu_custom_call.1} parent=15 // pred_region
          %s99 = sand.u32 %s29, 1
          %s100 = scalar_lea.sflag [#allocation7], %s99
          %s101 = sand.u32 %s29, 1
          %s102 = smul.addr %s101, 16
          %s103 = scalar_lea.vmem [#allocation6], %s102
          %p104 = scmp.lt.s32.totalorder %s15, 0
          %s105 = scalar_select %p104, %s15, 0
          %s106 = smul.u32 2, %s105
          %s108 = ssub.s32 256, 256
          %109 = vsyncadd %s100, %s108
          %s110 = smul.addr %s106, 128
          %s111 = scalar_lea.hbm %s1, %s110
          %s112 = sshll.u32 %s103, 4
          %s113 = int_to_ptr.vmem [resolvable:$true] %s112
          %118 = dma.hbm_to_vmem [thread:$0]  %s111, 256, %s113, %s100, 128, 128, 8
        $region20: #{tpu_custom_call.1} parent=15 // pred_fallthru
          _
      $region16: #{tpu_custom_call.1} parent=5 // pred_fallthru
        _
      %p119 = scmp.le.s32.totalorder 1, %s15
      %p120 = scmp.lt.s32.totalorder %s15, 3
      %p121 = pnand %p119, %p120
      %p122 = pneg %p121
      // Predicated region
      $region21: #{tpu_custom_call.1} parent=5 // pred_check
        _
      $region22: #{tpu_custom_call.1} parent=5 // pred_check_branch
        %124 = sbr.rel (%p121) target = $region24
      $region23: #{tpu_custom_call.1} parent=5 // pred_region
        %s125 = ssub.s32 %s15, 1
        %s126 = sand.u32 %s32, 1
        %s127 = scalar_lea.sflag [#allocation7], %s126
        %s128 = sand.u32 %s32, 1
        %s129 = smul.addr %s128, 16
        %s130 = scalar_lea.vmem [#allocation6], %s129
        // Predicated region
        $region25: #{tpu_custom_call.1} parent=23 // pred_check
          %p131 = pneg %p45
        $region26: #{tpu_custom_call.1} parent=23 // pred_check_branch
          %133 = sbr.rel (%p131) target = $region28
        $region27: #{tpu_custom_call.1} parent=23 // pred_region
          %134 = dma.done %s127, 256
        $region28: #{tpu_custom_call.1} parent=23 // pred_fallthru
          _
        %s135 = sand.u32 %s32, 1
        %s136 = scalar_lea.sflag [#allocation7], %s135
        %s137 = sand.u32 %s32, 1
        %s138 = smul.addr %s137, 16
        %s139 = scalar_lea.vmem [#allocation6], %s138
        %p140 = pneg %p45
        %p141 = pneg %p42
        %p142 = pneg %p77
        %p143 = pneg %p74
        %s144 = sand.u32 %s64, 1
        %s145 = scalar_lea.sflag [#allocation8], %s144
        %s146 = sand.u32 %s64, 1
        %s147 = smul.addr %s146, 16
        %s148 = scalar_lea.vmem [#allocation9], %s147
        %p149 = scmp.lt.s32.totalorder %s20, 0
        %s150 = scalar_select %p149, %s20, 0
        %s151 = smul.u32 2, %s150
        %s152 = ssub.s32 %s20, 1
        %p153 = scmp.gt.s32.totalorder %s152, 0
        %s154 = scalar_select %p153, %s152, 0
        %s155 = smul.u32 2, %s154
        %p156 = scmp.lt.s32.totalorder %s20, 1
        // Predicated region
        $region29: #{tpu_custom_call.1} parent=23 // pred_check
          %p157 = pneg %p156
        $region30: #{tpu_custom_call.1} parent=23 // pred_check_branch
          %159 = sbr.rel (%p157) target = $region32
        $region31: #{tpu_custom_call.1} parent=23 // pred_region
          %v160 = vld [vmem:[%s130] sm:$0xff]
          %v161 = vld [vmem:[%s130 + $0x8] sm:$0xff]
          %v164 = vshra.s32 %v160, 31
          %v165 = vshra.s32 %v161, 31
          %v166 = vand.u32 %v164, 1
          %v167 = vand.u32 %v165, 1
          %v168 = vshll.u32 %v160, 1
          %v169 = vshll.u32 %v161, 1
          %v170 = vor.u32 %v168, %v166
          %v171 = vor.u32 %v169, %v167
          %v172 = vxor.u32 %v170, 2147483648
          %v173 = vxor.u32 %v171, 2147483648
          %174 = vst [vmem:[#allocation2] sm:$0xff] %v172
          %175 = vst [vmem:[#allocation2 + $0x8] sm:$0xff] %v173
        $region32: #{tpu_custom_call.1} parent=23 // pred_fallthru
          _
        %p176 = scmp.eq.s32.totalorder %s20, 0
        // Predicated region
        $region33: #{tpu_custom_call.1} parent=23 // pred_check
          %p177 = pneg %p176
        $region34: #{tpu_custom_call.1} parent=23 // pred_check_branch
          %179 = sbr.rel (%p177) target = $region36
        $region35: #{tpu_custom_call.1} parent=23 // pred_region
          %s180 = sld [smem:[#allocation5]]
          %v181 = vld [vmem:[#allocation2] sm:$0xff]
          %v182 = vld [vmem:[#allocation2 + $0x8] sm:$0xff]
          %vm183 = vcmp.ge.s32.totalorder %v181, 0
          %vm184 = vcmp.ge.s32.totalorder %v182, 0
          %v185 = vsel %vm183, 1, 0
          %v186 = vsel %vm184, 1, 0
          %v187 = vadd.s32 %v185, %v186
          %v188 = vand.u32 %v187, 65535
          %v189 = vshrl.u32 %v187, 16
          %v190 = vcvt.s32.f32 %v188
          %v191 = vcvt.s32.f32 %v189
          %192 = vadd.xlane.f32.xlu0 %v190
          %v193 = vpop.xlane.xlu0 %192
          %194 = vadd.xlane.f32.xlu0 %v191
          %v195 = vpop.xlane.xlu0 %194
          %v196 = vcvt.f32.s32 %v193
          %v197 = vcvt.f32.s32 %v195
          %v198 = vshll.u32 %v197, 16
          %v199 = vadd.s32 %v198, %v196
          %v200 = vrot.slane %v199, 4
          %v201 = vadd.s32 %v199, %v200
          %v202 = vrot.slane %v201, 2
          %v203 = vadd.s32 %v201, %v202
          %v204 = vrot.slane %v203, 1
          %v205 = vadd.s32 %v203, %v204
          %s206 = vtos %v205
          %p207 = scmp.ge.s32.totalorder %s206, %s180
          %s208 = scalar_select %p207, 1073741824, 0
          %s209 = sor.u32 %s208, 536870912
          %s210 = sshll.u32 %s209, 1
          %s211 = sxor.u32 %s210, 2147483648
          %v212 = vstv %s211
          %vm213 = vcmp.ge.s32.totalorder %v181, %v212
          %vm214 = vcmp.ge.s32.totalorder %v182, %v212
          %v215 = vsel %vm213, 1, 0
          %v216 = vsel %vm214, 1, 0
          %v217 = vadd.s32 %v215, %v216
          %v218 = vand.u32 %v217, 65535
          %v219 = vshrl.u32 %v217, 16
          %v220 = vcvt.s32.f32 %v218
          %v221 = vcvt.s32.f32 %v219
          %222 = vadd.xlane.f32.xlu0 %v220
          %v223 = vpop.xlane.xlu0 %222
          %224 = vadd.xlane.f32.xlu0 %v221
          %v225 = vpop.xlane.xlu0 %224
          %v226 = vcvt.f32.s32 %v223
          %v227 = vcvt.f32.s32 %v225
          %v228 = vshll.u32 %v227, 16
          %v229 = vadd.s32 %v228, %v226
          %v230 = vrot.slane %v229, 4
          %v231 = vadd.s32 %v229, %v230
          %v232 = vrot.slane %v231, 2
          %v233 = vadd.s32 %v231, %v232
          %v234 = vrot.slane %v233, 1
          %v235 = vadd.s32 %v233, %v234
          %s236 = vtos %v235
          %p237 = scmp.ge.s32.totalorder %s236, %s180
          %s238 = scalar_select %p237, %s209, %s208
          %s239 = sor.u32 %s238, 268435456
          %s240 = sshll.u32 %s239, 1
          %s241 = sxor.u32 %s240, 2147483648
          %v242 = vstv %s241
          %vm243 = vcmp.ge.s32.totalorder %v181, %v242
          %vm244 = vcmp.ge.s32.totalorder %v182, %v242
          %v245 = vsel %vm243, 1, 0
          %v246 = vsel %vm244, 1, 0
          %v247 = vadd.s32 %v245, %v246
          %v248 = vand.u32 %v247, 65535
          %v249 = vshrl.u32 %v247, 16
          %v250 = vcvt.s32.f32 %v248
          %v251 = vcvt.s32.f32 %v249
          %252 = vadd.xlane.f32.xlu0 %v250
          %v253 = vpop.xlane.xlu0 %252
          %254 = vadd.xlane.f32.xlu0 %v251
          %v255 = vpop.xlane.xlu0 %254
          %v256 = vcvt.f32.s32 %v253
          %v257 = vcvt.f32.s32 %v255
          %v258 = vshll.u32 %v257, 16
          %v259 = vadd.s32 %v258, %v256
          %v260 = vrot.slane %v259, 4
          %v261 = vadd.s32 %v259, %v260
          %v262 = vrot.slane %v261, 2
          %v263 = vadd.s32 %v261, %v262
          %v264 = vrot.slane %v263, 1
          %v265 = vadd.s32 %v263, %v264
          %s266 = vtos %v265
          %p267 = scmp.ge.s32.totalorder %s266, %s180
          %s268 = scalar_select %p267, %s239, %s238
          %s269 = sor.u32 %s268, 134217728
          %s270 = sshll.u32 %s269, 1
          %s271 = sxor.u32 %s270, 2147483648
          %v272 = vstv %s271
          %vm273 = vcmp.ge.s32.totalorder %v181, %v272
          %vm274 = vcmp.ge.s32.totalorder %v182, %v272
          %v275 = vsel %vm273, 1, 0
          %v276 = vsel %vm274, 1, 0
          %v277 = vadd.s32 %v275, %v276
          %v278 = vand.u32 %v277, 65535
          %v279 = vshrl.u32 %v277, 16
          %v280 = vcvt.s32.f32 %v278
          %v281 = vcvt.s32.f32 %v279
          %282 = vadd.xlane.f32.xlu0 %v280
          %v283 = vpop.xlane.xlu0 %282
          %284 = vadd.xlane.f32.xlu0 %v281
          %v285 = vpop.xlane.xlu0 %284
          %v286 = vcvt.f32.s32 %v283
          %v287 = vcvt.f32.s32 %v285
          %v288 = vshll.u32 %v287, 16
          %v289 = vadd.s32 %v288, %v286
          %v290 = vrot.slane %v289, 4
          %v291 = vadd.s32 %v289, %v290
          %v292 = vrot.slane %v291, 2
          %v293 = vadd.s32 %v291, %v292
          %v294 = vrot.slane %v293, 1
          %v295 = vadd.s32 %v293, %v294
          %s296 = vtos %v295
          %p297 = scmp.ge.s32.totalorder %s296, %s180
          %s298 = scalar_select %p297, %s269, %s268
          %s299 = sor.u32 %s298, 67108864
          %s300 = sshll.u32 %s299, 1
          %s301 = sxor.u32 %s300, 2147483648
          %v302 = vstv %s301
          %vm303 = vcmp.ge.s32.totalorder %v181, %v302
          %vm304 = vcmp.ge.s32.totalorder %v182, %v302
          %v305 = vsel %vm303, 1, 0
          %v306 = vsel %vm304, 1, 0
          %v307 = vadd.s32 %v305, %v306
          %v308 = vand.u32 %v307, 65535
          %v309 = vshrl.u32 %v307, 16
          %v310 = vcvt.s32.f32 %v308
          %v311 = vcvt.s32.f32 %v309
          %312 = vadd.xlane.f32.xlu0 %v310
          %v313 = vpop.xlane.xlu0 %312
          %314 = vadd.xlane.f32.xlu0 %v311
          %v315 = vpop.xlane.xlu0 %314
          %v316 = vcvt.f32.s32 %v313
          %v317 = vcvt.f32.s32 %v315
          %v318 = vshll.u32 %v317, 16
          %v319 = vadd.s32 %v318, %v316
          %v320 = vrot.slane %v319, 4
          %v321 = vadd.s32 %v319, %v320
          %v322 = vrot.slane %v321, 2
          %v323 = vadd.s32 %v321, %v322
          %v324 = vrot.slane %v323, 1
          %v325 = vadd.s32 %v323, %v324
          %s326 = vtos %v325
          %p327 = scmp.ge.s32.totalorder %s326, %s180
          %s328 = scalar_select %p327, %s299, %s298
          %s329 = sor.u32 %s328, 33554432
          %s330 = sshll.u32 %s329, 1
          %s331 = sxor.u32 %s330, 2147483648
          %v332 = vstv %s331
          %vm333 = vcmp.ge.s32.totalorder %v181, %v332
          %vm334 = vcmp.ge.s32.totalorder %v182, %v332
          %v335 = vsel %vm333, 1, 0
          %v336 = vsel %vm334, 1, 0
          %v337 = vadd.s32 %v335, %v336
          %v338 = vand.u32 %v337, 65535
          %v339 = vshrl.u32 %v337, 16
          %v340 = vcvt.s32.f32 %v338
          %v341 = vcvt.s32.f32 %v339
          %342 = vadd.xlane.f32.xlu0 %v340
          %v343 = vpop.xlane.xlu0 %342
          %344 = vadd.xlane.f32.xlu0 %v341
          %v345 = vpop.xlane.xlu0 %344
          %v346 = vcvt.f32.s32 %v343
          %v347 = vcvt.f32.s32 %v345
          %v348 = vshll.u32 %v347, 16
          %v349 = vadd.s32 %v348, %v346
          %v350 = vrot.slane %v349, 4
          %v351 = vadd.s32 %v349, %v350
          %v352 = vrot.slane %v351, 2
          %v353 = vadd.s32 %v351, %v352
          %v354 = vrot.slane %v353, 1
          %v355 = vadd.s32 %v353, %v354
          %s356 = vtos %v355
          %p357 = scmp.ge.s32.totalorder %s356, %s180
          %s358 = scalar_select %p357, %s329, %s328
          %s359 = sor.u32 %s358, 16777216
          %s360 = sshll.u32 %s359, 1
          %s361 = sxor.u32 %s360, 2147483648
          %v362 = vstv %s361
          %vm363 = vcmp.ge.s32.totalorder %v181, %v362
          %vm364 = vcmp.ge.s32.totalorder %v182, %v362
          %v365 = vsel %vm363, 1, 0
          %v366 = vsel %vm364, 1, 0
          %v367 = vadd.s32 %v365, %v366
          %v368 = vand.u32 %v367, 65535
          %v369 = vshrl.u32 %v367, 16
          %v370 = vcvt.s32.f32 %v368
          %v371 = vcvt.s32.f32 %v369
          %372 = vadd.xlane.f32.xlu0 %v370
          %v373 = vpop.xlane.xlu0 %372
          %374 = vadd.xlane.f32.xlu0 %v371
          %v375 = vpop.xlane.xlu0 %374
          %v376 = vcvt.f32.s32 %v373
          %v377 = vcvt.f32.s32 %v375
          %v378 = vshll.u32 %v377, 16
          %v379 = vadd.s32 %v378, %v376
          %v380 = vrot.slane %v379, 4
          %v381 = vadd.s32 %v379, %v380
          %v382 = vrot.slane %v381, 2
          %v383 = vadd.s32 %v381, %v382
          %v384 = vrot.slane %v383, 1
          %v385 = vadd.s32 %v383, %v384
          %s386 = vtos %v385
          %p387 = scmp.ge.s32.totalorder %s386, %s180
          %s388 = scalar_select %p387, %s359, %s358
          %s389 = sor.u32 %s388, 8388608
          %s390 = sshll.u32 %s389, 1
          %s391 = sxor.u32 %s390, 2147483648
          %v392 = vstv %s391
          %vm393 = vcmp.ge.s32.totalorder %v181, %v392
          %vm394 = vcmp.ge.s32.totalorder %v182, %v392
          %v395 = vsel %vm393, 1, 0
          %v396 = vsel %vm394, 1, 0
          %v397 = vadd.s32 %v395, %v396
          %v398 = vand.u32 %v397, 65535
          %v399 = vshrl.u32 %v397, 16
          %v400 = vcvt.s32.f32 %v398
          %v401 = vcvt.s32.f32 %v399
          %402 = vadd.xlane.f32.xlu0 %v400
          %v403 = vpop.xlane.xlu0 %402
          %404 = vadd.xlane.f32.xlu0 %v401
          %v405 = vpop.xlane.xlu0 %404
          %v406 = vcvt.f32.s32 %v403
          %v407 = vcvt.f32.s32 %v405
          %v408 = vshll.u32 %v407, 16
          %v409 = vadd.s32 %v408, %v406
          %v410 = vrot.slane %v409, 4
          %v411 = vadd.s32 %v409, %v410
          %v412 = vrot.slane %v411, 2
          %v413 = vadd.s32 %v411, %v412
          %v414 = vrot.slane %v413, 1
          %v415 = vadd.s32 %v413, %v414
          %s416 = vtos %v415
          %p417 = scmp.ge.s32.totalorder %s416, %s180
          %s418 = scalar_select %p417, %s389, %s388
          %s419 = sor.u32 %s418, 4194304
          %s420 = sshll.u32 %s419, 1
          %s421 = sxor.u32 %s420, 2147483648
          %v422 = vstv %s421
          %vm423 = vcmp.ge.s32.totalorder %v181, %v422
          %vm424 = vcmp.ge.s32.totalorder %v182, %v422
          %v425 = vsel %vm423, 1, 0
          %v426 = vsel %vm424, 1, 0
          %v427 = vadd.s32 %v425, %v426
          %v428 = vand.u32 %v427, 65535
          %v429 = vshrl.u32 %v427, 16
          %v430 = vcvt.s32.f32 %v428
          %v431 = vcvt.s32.f32 %v429
          %432 = vadd.xlane.f32.xlu0 %v430
          %v433 = vpop.xlane.xlu0 %432
          %434 = vadd.xlane.f32.xlu0 %v431
          %v435 = vpop.xlane.xlu0 %434
          %v436 = vcvt.f32.s32 %v433
          %v437 = vcvt.f32.s32 %v435
          %v438 = vshll.u32 %v437, 16
          %v439 = vadd.s32 %v438, %v436
          %v440 = vrot.slane %v439, 4
          %v441 = vadd.s32 %v439, %v440
          %v442 = vrot.slane %v441, 2
          %v443 = vadd.s32 %v441, %v442
          %v444 = vrot.slane %v443, 1
          %v445 = vadd.s32 %v443, %v444
          %s446 = vtos %v445
          %p447 = scmp.ge.s32.totalorder %s446, %s180
          %s448 = scalar_select %p447, %s419, %s418
          %s449 = sor.u32 %s448, 2097152
          %s450 = sshll.u32 %s449, 1
          %s451 = sxor.u32 %s450, 2147483648
          %v452 = vstv %s451
          %vm453 = vcmp.ge.s32.totalorder %v181, %v452
          %vm454 = vcmp.ge.s32.totalorder %v182, %v452
          %v455 = vsel %vm453, 1, 0
          %v456 = vsel %vm454, 1, 0
          %v457 = vadd.s32 %v455, %v456
          %v458 = vand.u32 %v457, 65535
          %v459 = vshrl.u32 %v457, 16
          %v460 = vcvt.s32.f32 %v458
          %v461 = vcvt.s32.f32 %v459
          %462 = vadd.xlane.f32.xlu0 %v460
          %v463 = vpop.xlane.xlu0 %462
          %464 = vadd.xlane.f32.xlu0 %v461
          %v465 = vpop.xlane.xlu0 %464
          %v466 = vcvt.f32.s32 %v463
          %v467 = vcvt.f32.s32 %v465
          %v468 = vshll.u32 %v467, 16
          %v469 = vadd.s32 %v468, %v466
          %v470 = vrot.slane %v469, 4
          %v471 = vadd.s32 %v469, %v470
          %v472 = vrot.slane %v471, 2
          %v473 = vadd.s32 %v471, %v472
          %v474 = vrot.slane %v473, 1
          %v475 = vadd.s32 %v473, %v474
          %s476 = vtos %v475
          %p477 = scmp.ge.s32.totalorder %s476, %s180
          %s478 = scalar_select %p477, %s449, %s448
          %s479 = sor.u32 %s478, 1048576
          %s480 = sshll.u32 %s479, 1
          %s481 = sxor.u32 %s480, 2147483648
          %v482 = vstv %s481
          %vm483 = vcmp.ge.s32.totalorder %v181, %v482
          %vm484 = vcmp.ge.s32.totalorder %v182, %v482
          %v485 = vsel %vm483, 1, 0
          %v486 = vsel %vm484, 1, 0
          %v487 = vadd.s32 %v485, %v486
          %v488 = vand.u32 %v487, 65535
          %v489 = vshrl.u32 %v487, 16
          %v490 = vcvt.s32.f32 %v488
          %v491 = vcvt.s32.f32 %v489
          %492 = vadd.xlane.f32.xlu0 %v490
          %v493 = vpop.xlane.xlu0 %492
          %494 = vadd.xlane.f32.xlu0 %v491
          %v495 = vpop.xlane.xlu0 %494
          %v496 = vcvt.f32.s32 %v493
          %v497 = vcvt.f32.s32 %v495
          %v498 = vshll.u32 %v497, 16
          %v499 = vadd.s32 %v498, %v496
          %v500 = vrot.slane %v499, 4
          %v501 = vadd.s32 %v499, %v500
          %v502 = vrot.slane %v501, 2
          %v503 = vadd.s32 %v501, %v502
          %v504 = vrot.slane %v503, 1
          %v505 = vadd.s32 %v503, %v504
          %s506 = vtos %v505
          %p507 = scmp.ge.s32.totalorder %s506, %s180
          %s508 = scalar_select %p507, %s479, %s478
          %s509 = sor.u32 %s508, 524288
          %s510 = sshll.u32 %s509, 1
          %s511 = sxor.u32 %s510, 2147483648
          %v512 = vstv %s511
          %vm513 = vcmp.ge.s32.totalorder %v181, %v512
          %vm514 = vcmp.ge.s32.totalorder %v182, %v512
          %v515 = vsel %vm513, 1, 0
          %v516 = vsel %vm514, 1, 0
          %v517 = vadd.s32 %v515, %v516
          %v518 = vand.u32 %v517, 65535
          %v519 = vshrl.u32 %v517, 16
          %v520 = vcvt.s32.f32 %v518
          %v521 = vcvt.s32.f32 %v519
          %522 = vadd.xlane.f32.xlu0 %v520
          %v523 = vpop.xlane.xlu0 %522
          %524 = vadd.xlane.f32.xlu0 %v521
          %v525 = vpop.xlane.xlu0 %524
          %v526 = vcvt.f32.s32 %v523
          %v527 = vcvt.f32.s32 %v525
          %v528 = vshll.u32 %v527, 16
          %v529 = vadd.s32 %v528, %v526
          %v530 = vrot.slane %v529, 4
          %v531 = vadd.s32 %v529, %v530
          %v532 = vrot.slane %v531, 2
          %v533 = vadd.s32 %v531, %v532
          %v534 = vrot.slane %v533, 1
          %v535 = vadd.s32 %v533, %v534
          %s536 = vtos %v535
          %p537 = scmp.ge.s32.totalorder %s536, %s180
          %s538 = scalar_select %p537, %s509, %s508
          %s539 = sor.u32 %s538, 262144
          %s540 = sshll.u32 %s539, 1
          %s541 = sxor.u32 %s540, 2147483648
          %v542 = vstv %s541
          %vm543 = vcmp.ge.s32.totalorder %v181, %v542
          %vm544 = vcmp.ge.s32.totalorder %v182, %v542
          %v545 = vsel %vm543, 1, 0
          %v546 = vsel %vm544, 1, 0
          %v547 = vadd.s32 %v545, %v546
          %v548 = vand.u32 %v547, 65535
          %v549 = vshrl.u32 %v547, 16
          %v550 = vcvt.s32.f32 %v548
          %v551 = vcvt.s32.f32 %v549
          %552 = vadd.xlane.f32.xlu0 %v550
          %v553 = vpop.xlane.xlu0 %552
          %554 = vadd.xlane.f32.xlu0 %v551
          %v555 = vpop.xlane.xlu0 %554
          %v556 = vcvt.f32.s32 %v553
          %v557 = vcvt.f32.s32 %v555
          %v558 = vshll.u32 %v557, 16
          %v559 = vadd.s32 %v558, %v556
          %v560 = vrot.slane %v559, 4
          %v561 = vadd.s32 %v559, %v560
          %v562 = vrot.slane %v561, 2
          %v563 = vadd.s32 %v561, %v562
          %v564 = vrot.slane %v563, 1
          %v565 = vadd.s32 %v563, %v564
          %s566 = vtos %v565
          %p567 = scmp.ge.s32.totalorder %s566, %s180
          %s568 = scalar_select %p567, %s539, %s538
          %s569 = sor.u32 %s568, 131072
          %s570 = sshll.u32 %s569, 1
          %s571 = sxor.u32 %s570, 2147483648
          %v572 = vstv %s571
          %vm573 = vcmp.ge.s32.totalorder %v181, %v572
          %vm574 = vcmp.ge.s32.totalorder %v182, %v572
          %v575 = vsel %vm573, 1, 0
          %v576 = vsel %vm574, 1, 0
          %v577 = vadd.s32 %v575, %v576
          %v578 = vand.u32 %v577, 65535
          %v579 = vshrl.u32 %v577, 16
          %v580 = vcvt.s32.f32 %v578
          %v581 = vcvt.s32.f32 %v579
          %582 = vadd.xlane.f32.xlu0 %v580
          %v583 = vpop.xlane.xlu0 %582
          %584 = vadd.xlane.f32.xlu0 %v581
          %v585 = vpop.xlane.xlu0 %584
          %v586 = vcvt.f32.s32 %v583
          %v587 = vcvt.f32.s32 %v585
          %v588 = vshll.u32 %v587, 16
          %v589 = vadd.s32 %v588, %v586
          %v590 = vrot.slane %v589, 4
          %v591 = vadd.s32 %v589, %v590
          %v592 = vrot.slane %v591, 2
          %v593 = vadd.s32 %v591, %v592
          %v594 = vrot.slane %v593, 1
          %v595 = vadd.s32 %v593, %v594
          %s596 = vtos %v595
          %p597 = scmp.ge.s32.totalorder %s596, %s180
          %s598 = scalar_select %p597, %s569, %s568
          %s599 = sor.u32 %s598, 65536
          %s600 = sshll.u32 %s599, 1
          %s601 = sxor.u32 %s600, 2147483648
          %v602 = vstv %s601
          %vm603 = vcmp.ge.s32.totalorder %v181, %v602
          %vm604 = vcmp.ge.s32.totalorder %v182, %v602
          %v605 = vsel %vm603, 1, 0
          %v606 = vsel %vm604, 1, 0
          %v607 = vadd.s32 %v605, %v606
          %v608 = vand.u32 %v607, 65535
          %v609 = vshrl.u32 %v607, 16
          %v610 = vcvt.s32.f32 %v608
          %v611 = vcvt.s32.f32 %v609
          %612 = vadd.xlane.f32.xlu0 %v610
          %v613 = vpop.xlane.xlu0 %612
          %614 = vadd.xlane.f32.xlu0 %v611
          %v615 = vpop.xlane.xlu0 %614
          %v616 = vcvt.f32.s32 %v613
          %v617 = vcvt.f32.s32 %v615
          %v618 = vshll.u32 %v617, 16
          %v619 = vadd.s32 %v618, %v616
          %v620 = vrot.slane %v619, 4
          %v621 = vadd.s32 %v619, %v620
          %v622 = vrot.slane %v621, 2
          %v623 = vadd.s32 %v621, %v622
          %v624 = vrot.slane %v623, 1
          %v625 = vadd.s32 %v623, %v624
          %s626 = vtos %v625
          %p627 = scmp.ge.s32.totalorder %s626, %s180
          %s628 = scalar_select %p627, %s599, %s598
          %s629 = sor.u32 %s628, 32768
          %s630 = sshll.u32 %s629, 1
          %s631 = sxor.u32 %s630, 2147483648
          %v632 = vstv %s631
          %vm633 = vcmp.ge.s32.totalorder %v181, %v632
          %vm634 = vcmp.ge.s32.totalorder %v182, %v632
          %v635 = vsel %vm633, 1, 0
          %v636 = vsel %vm634, 1, 0
          %v637 = vadd.s32 %v635, %v636
          %v638 = vand.u32 %v637, 65535
          %v639 = vshrl.u32 %v637, 16
          %v640 = vcvt.s32.f32 %v638
          %v641 = vcvt.s32.f32 %v639
          %642 = vadd.xlane.f32.xlu0 %v640
          %v643 = vpop.xlane.xlu0 %642
          %644 = vadd.xlane.f32.xlu0 %v641
          %v645 = vpop.xlane.xlu0 %644
          %v646 = vcvt.f32.s32 %v643
          %v647 = vcvt.f32.s32 %v645
          %v648 = vshll.u32 %v647, 16
          %v649 = vadd.s32 %v648, %v646
          %v650 = vrot.slane %v649, 4
          %v651 = vadd.s32 %v649, %v650
          %v652 = vrot.slane %v651, 2
          %v653 = vadd.s32 %v651, %v652
          %v654 = vrot.slane %v653, 1
          %v655 = vadd.s32 %v653, %v654
          %s656 = vtos %v655
          %p657 = scmp.ge.s32.totalorder %s656, %s180
          %s658 = scalar_select %p657, %s629, %s628
          %s659 = sor.u32 %s658, 16384
          %s660 = sshll.u32 %s659, 1
          %s661 = sxor.u32 %s660, 2147483648
          %v662 = vstv %s661
          %vm663 = vcmp.ge.s32.totalorder %v181, %v662
          %vm664 = vcmp.ge.s32.totalorder %v182, %v662
          %v665 = vsel %vm663, 1, 0
          %v666 = vsel %vm664, 1, 0
          %v667 = vadd.s32 %v665, %v666
          %v668 = vand.u32 %v667, 65535
          %v669 = vshrl.u32 %v667, 16
          %v670 = vcvt.s32.f32 %v668
          %v671 = vcvt.s32.f32 %v669
          %672 = vadd.xlane.f32.xlu0 %v670
          %v673 = vpop.xlane.xlu0 %672
          %674 = vadd.xlane.f32.xlu0 %v671
          %v675 = vpop.xlane.xlu0 %674
          %v676 = vcvt.f32.s32 %v673
          %v677 = vcvt.f32.s32 %v675
          %v678 = vshll.u32 %v677, 16
          %v679 = vadd.s32 %v678, %v676
          %v680 = vrot.slane %v679, 4
          %v681 = vadd.s32 %v679, %v680
          %v682 = vrot.slane %v681, 2
          %v683 = vadd.s32 %v681, %v682
          %v684 = vrot.slane %v683, 1
          %v685 = vadd.s32 %v683, %v684
          %s686 = vtos %v685
          %p687 = scmp.ge.s32.totalorder %s686, %s180
          %s688 = scalar_select %p687, %s659, %s658
          %s689 = sor.u32 %s688, 8192
          %s690 = sshll.u32 %s689, 1
          %s691 = sxor.u32 %s690, 2147483648
          %v692 = vstv %s691
          %vm693 = vcmp.ge.s32.totalorder %v181, %v692
          %vm694 = vcmp.ge.s32.totalorder %v182, %v692
          %v695 = vsel %vm693, 1, 0
          %v696 = vsel %vm694, 1, 0
          %v697 = vadd.s32 %v695, %v696
          %v698 = vand.u32 %v697, 65535
          %v699 = vshrl.u32 %v697, 16
          %v700 = vcvt.s32.f32 %v698
          %v701 = vcvt.s32.f32 %v699
          %702 = vadd.xlane.f32.xlu0 %v700
          %v703 = vpop.xlane.xlu0 %702
          %704 = vadd.xlane.f32.xlu0 %v701
          %v705 = vpop.xlane.xlu0 %704
          %v706 = vcvt.f32.s32 %v703
          %v707 = vcvt.f32.s32 %v705
          %v708 = vshll.u32 %v707, 16
          %v709 = vadd.s32 %v708, %v706
          %v710 = vrot.slane %v709, 4
          %v711 = vadd.s32 %v709, %v710
          %v712 = vrot.slane %v711, 2
          %v713 = vadd.s32 %v711, %v712
          %v714 = vrot.slane %v713, 1
          %v715 = vadd.s32 %v713, %v714
          %s716 = vtos %v715
          %p717 = scmp.ge.s32.totalorder %s716, %s180
          %s718 = scalar_select %p717, %s689, %s688
          %s719 = sor.u32 %s718, 4096
          %s720 = sshll.u32 %s719, 1
          %s721 = sxor.u32 %s720, 2147483648
          %v722 = vstv %s721
          %vm723 = vcmp.ge.s32.totalorder %v181, %v722
          %vm724 = vcmp.ge.s32.totalorder %v182, %v722
          %v725 = vsel %vm723, 1, 0
          %v726 = vsel %vm724, 1, 0
          %v727 = vadd.s32 %v725, %v726
          %v728 = vand.u32 %v727, 65535
          %v729 = vshrl.u32 %v727, 16
          %v730 = vcvt.s32.f32 %v728
          %v731 = vcvt.s32.f32 %v729
          %732 = vadd.xlane.f32.xlu0 %v730
          %v733 = vpop.xlane.xlu0 %732
          %734 = vadd.xlane.f32.xlu0 %v731
          %v735 = vpop.xlane.xlu0 %734
          %v736 = vcvt.f32.s32 %v733
          %v737 = vcvt.f32.s32 %v735
          %v738 = vshll.u32 %v737, 16
          %v739 = vadd.s32 %v738, %v736
          %v740 = vrot.slane %v739, 4
          %v741 = vadd.s32 %v739, %v740
          %v742 = vrot.slane %v741, 2
          %v743 = vadd.s32 %v741, %v742
          %v744 = vrot.slane %v743, 1
          %v745 = vadd.s32 %v743, %v744
          %s746 = vtos %v745
          %p747 = scmp.ge.s32.totalorder %s746, %s180
          %s748 = scalar_select %p747, %s719, %s718
          %s749 = sor.u32 %s748, 2048
          %s750 = sshll.u32 %s749, 1
          %s751 = sxor.u32 %s750, 2147483648
          %v752 = vstv %s751
          %vm753 = vcmp.ge.s32.totalorder %v181, %v752
          %vm754 = vcmp.ge.s32.totalorder %v182, %v752
          %v755 = vsel %vm753, 1, 0
          %v756 = vsel %vm754, 1, 0
          %v757 = vadd.s32 %v755, %v756
          %v758 = vand.u32 %v757, 65535
          %v759 = vshrl.u32 %v757, 16
          %v760 = vcvt.s32.f32 %v758
          %v761 = vcvt.s32.f32 %v759
          %762 = vadd.xlane.f32.xlu0 %v760
          %v763 = vpop.xlane.xlu0 %762
          %764 = vadd.xlane.f32.xlu0 %v761
          %v765 = vpop.xlane.xlu0 %764
          %v766 = vcvt.f32.s32 %v763
          %v767 = vcvt.f32.s32 %v765
          %v768 = vshll.u32 %v767, 16
          %v769 = vadd.s32 %v768, %v766
          %v770 = vrot.slane %v769, 4
          %v771 = vadd.s32 %v769, %v770
          %v772 = vrot.slane %v771, 2
          %v773 = vadd.s32 %v771, %v772
          %v774 = vrot.slane %v773, 1
          %v775 = vadd.s32 %v773, %v774
          %s776 = vtos %v775
          %p777 = scmp.ge.s32.totalorder %s776, %s180
          %s778 = scalar_select %p777, %s749, %s748
          %s779 = sor.u32 %s778, 1024
          %s780 = sshll.u32 %s779, 1
          %s781 = sxor.u32 %s780, 2147483648
          %v782 = vstv %s781
          %vm783 = vcmp.ge.s32.totalorder %v181, %v782
          %vm784 = vcmp.ge.s32.totalorder %v182, %v782
          %v785 = vsel %vm783, 1, 0
          %v786 = vsel %vm784, 1, 0
          %v787 = vadd.s32 %v785, %v786
          %v788 = vand.u32 %v787, 65535
          %v789 = vshrl.u32 %v787, 16
          %v790 = vcvt.s32.f32 %v788
          %v791 = vcvt.s32.f32 %v789
          %792 = vadd.xlane.f32.xlu0 %v790
          %v793 = vpop.xlane.xlu0 %792
          %794 = vadd.xlane.f32.xlu0 %v791
          %v795 = vpop.xlane.xlu0 %794
          %v796 = vcvt.f32.s32 %v793
          %v797 = vcvt.f32.s32 %v795
          %v798 = vshll.u32 %v797, 16
          %v799 = vadd.s32 %v798, %v796
          %v800 = vrot.slane %v799, 4
          %v801 = vadd.s32 %v799, %v800
          %v802 = vrot.slane %v801, 2
          %v803 = vadd.s32 %v801, %v802
          %v804 = vrot.slane %v803, 1
          %v805 = vadd.s32 %v803, %v804
          %s806 = vtos %v805
          %p807 = scmp.ge.s32.totalorder %s806, %s180
          %s808 = scalar_select %p807, %s779, %s778
          %s809 = sor.u32 %s808, 512
          %s810 = sshll.u32 %s809, 1
          %s811 = sxor.u32 %s810, 2147483648
          %v812 = vstv %s811
          %vm813 = vcmp.ge.s32.totalorder %v181, %v812
          %vm814 = vcmp.ge.s32.totalorder %v182, %v812
          %v815 = vsel %vm813, 1, 0
          %v816 = vsel %vm814, 1, 0
          %v817 = vadd.s32 %v815, %v816
          %v818 = vand.u32 %v817, 65535
          %v819 = vshrl.u32 %v817, 16
          %v820 = vcvt.s32.f32 %v818
          %v821 = vcvt.s32.f32 %v819
          %822 = vadd.xlane.f32.xlu0 %v820
          %v823 = vpop.xlane.xlu0 %822
          %824 = vadd.xlane.f32.xlu0 %v821
          %v825 = vpop.xlane.xlu0 %824
          %v826 = vcvt.f32.s32 %v823
          %v827 = vcvt.f32.s32 %v825
          %v828 = vshll.u32 %v827, 16
          %v829 = vadd.s32 %v828, %v826
          %v830 = vrot.slane %v829, 4
          %v831 = vadd.s32 %v829, %v830
          %v832 = vrot.slane %v831, 2
          %v833 = vadd.s32 %v831, %v832
          %v834 = vrot.slane %v833, 1
          %v835 = vadd.s32 %v833, %v834
          %s836 = vtos %v835
          %p837 = scmp.ge.s32.totalorder %s836, %s180
          %s838 = scalar_select %p837, %s809, %s808
          %s839 = sor.u32 %s838, 256
          %s840 = sshll.u32 %s839, 1
          %s841 = sxor.u32 %s840, 2147483648
          %v842 = vstv %s841
          %vm843 = vcmp.ge.s32.totalorder %v181, %v842
          %vm844 = vcmp.ge.s32.totalorder %v182, %v842
          %v845 = vsel %vm843, 1, 0
          %v846 = vsel %vm844, 1, 0
          %v847 = vadd.s32 %v845, %v846
          %v848 = vand.u32 %v847, 65535
          %v849 = vshrl.u32 %v847, 16
          %v850 = vcvt.s32.f32 %v848
          %v851 = vcvt.s32.f32 %v849
          %852 = vadd.xlane.f32.xlu0 %v850
          %v853 = vpop.xlane.xlu0 %852
          %854 = vadd.xlane.f32.xlu0 %v851
          %v855 = vpop.xlane.xlu0 %854
          %v856 = vcvt.f32.s32 %v853
          %v857 = vcvt.f32.s32 %v855
          %v858 = vshll.u32 %v857, 16
          %v859 = vadd.s32 %v858, %v856
          %v860 = vrot.slane %v859, 4
          %v861 = vadd.s32 %v859, %v860
          %v862 = vrot.slane %v861, 2
          %v863 = vadd.s32 %v861, %v862
          %v864 = vrot.slane %v863, 1
          %v865 = vadd.s32 %v863, %v864
          %s866 = vtos %v865
          %p867 = scmp.ge.s32.totalorder %s866, %s180
          %s868 = scalar_select %p867, %s839, %s838
          %s869 = sor.u32 %s868, 128
          %s870 = sshll.u32 %s869, 1
          %s871 = sxor.u32 %s870, 2147483648
          %v872 = vstv %s871
          %vm873 = vcmp.ge.s32.totalorder %v181, %v872
          %vm874 = vcmp.ge.s32.totalorder %v182, %v872
          %v875 = vsel %vm873, 1, 0
          %v876 = vsel %vm874, 1, 0
          %v877 = vadd.s32 %v875, %v876
          %v878 = vand.u32 %v877, 65535
          %v879 = vshrl.u32 %v877, 16
          %v880 = vcvt.s32.f32 %v878
          %v881 = vcvt.s32.f32 %v879
          %882 = vadd.xlane.f32.xlu0 %v880
          %v883 = vpop.xlane.xlu0 %882
          %884 = vadd.xlane.f32.xlu0 %v881
          %v885 = vpop.xlane.xlu0 %884
          %v886 = vcvt.f32.s32 %v883
          %v887 = vcvt.f32.s32 %v885
          %v888 = vshll.u32 %v887, 16
          %v889 = vadd.s32 %v888, %v886
          %v890 = vrot.slane %v889, 4
          %v891 = vadd.s32 %v889, %v890
          %v892 = vrot.slane %v891, 2
          %v893 = vadd.s32 %v891, %v892
          %v894 = vrot.slane %v893, 1
          %v895 = vadd.s32 %v893, %v894
          %s896 = vtos %v895
          %p897 = scmp.ge.s32.totalorder %s896, %s180
          %s898 = scalar_select %p897, %s869, %s868
          %s899 = sor.u32 %s898, 64
          %s900 = sshll.u32 %s899, 1
          %s901 = sxor.u32 %s900, 2147483648
          %v902 = vstv %s901
          %vm903 = vcmp.ge.s32.totalorder %v181, %v902
          %vm904 = vcmp.ge.s32.totalorder %v182, %v902
          %v905 = vsel %vm903, 1, 0
          %v906 = vsel %vm904, 1, 0
          %v907 = vadd.s32 %v905, %v906
          %v908 = vand.u32 %v907, 65535
          %v909 = vshrl.u32 %v907, 16
          %v910 = vcvt.s32.f32 %v908
          %v911 = vcvt.s32.f32 %v909
          %912 = vadd.xlane.f32.xlu0 %v910
          %v913 = vpop.xlane.xlu0 %912
          %914 = vadd.xlane.f32.xlu0 %v911
          %v915 = vpop.xlane.xlu0 %914
          %v916 = vcvt.f32.s32 %v913
          %v917 = vcvt.f32.s32 %v915
          %v918 = vshll.u32 %v917, 16
          %v919 = vadd.s32 %v918, %v916
          %v920 = vrot.slane %v919, 4
          %v921 = vadd.s32 %v919, %v920
          %v922 = vrot.slane %v921, 2
          %v923 = vadd.s32 %v921, %v922
          %v924 = vrot.slane %v923, 1
          %v925 = vadd.s32 %v923, %v924
          %s926 = vtos %v925
          %p927 = scmp.ge.s32.totalorder %s926, %s180
          %s928 = scalar_select %p927, %s899, %s898
          %s929 = sor.u32 %s928, 32
          %s930 = sshll.u32 %s929, 1
          %s931 = sxor.u32 %s930, 2147483648
          %v932 = vstv %s931
          %vm933 = vcmp.ge.s32.totalorder %v181, %v932
          %vm934 = vcmp.ge.s32.totalorder %v182, %v932
          %v935 = vsel %vm933, 1, 0
          %v936 = vsel %vm934, 1, 0
          %v937 = vadd.s32 %v935, %v936
          %v938 = vand.u32 %v937, 65535
          %v939 = vshrl.u32 %v937, 16
          %v940 = vcvt.s32.f32 %v938
          %v941 = vcvt.s32.f32 %v939
          %942 = vadd.xlane.f32.xlu0 %v940
          %v943 = vpop.xlane.xlu0 %942
          %944 = vadd.xlane.f32.xlu0 %v941
          %v945 = vpop.xlane.xlu0 %944
          %v946 = vcvt.f32.s32 %v943
          %v947 = vcvt.f32.s32 %v945
          %v948 = vshll.u32 %v947, 16
          %v949 = vadd.s32 %v948, %v946
          %v950 = vrot.slane %v949, 4
          %v951 = vadd.s32 %v949, %v950
          %v952 = vrot.slane %v951, 2
          %v953 = vadd.s32 %v951, %v952
          %v954 = vrot.slane %v953, 1
          %v955 = vadd.s32 %v953, %v954
          %s956 = vtos %v955
          %p957 = scmp.ge.s32.totalorder %s956, %s180
          %s958 = scalar_select %p957, %s929, %s928
          %s959 = sor.u32 %s958, 16
          %s960 = sshll.u32 %s959, 1
          %s961 = sxor.u32 %s960, 2147483648
          %v962 = vstv %s961
          %vm963 = vcmp.ge.s32.totalorder %v181, %v962
          %vm964 = vcmp.ge.s32.totalorder %v182, %v962
          %v965 = vsel %vm963, 1, 0
          %v966 = vsel %vm964, 1, 0
          %v967 = vadd.s32 %v965, %v966
          %v968 = vand.u32 %v967, 65535
          %v969 = vshrl.u32 %v967, 16
          %v970 = vcvt.s32.f32 %v968
          %v971 = vcvt.s32.f32 %v969
          %972 = vadd.xlane.f32.xlu0 %v970
          %v973 = vpop.xlane.xlu0 %972
          %974 = vadd.xlane.f32.xlu0 %v971
          %v975 = vpop.xlane.xlu0 %974
          %v976 = vcvt.f32.s32 %v973
          %v977 = vcvt.f32.s32 %v975
          %v978 = vshll.u32 %v977, 16
          %v979 = vadd.s32 %v978, %v976
          %v980 = vrot.slane %v979, 4
          %v981 = vadd.s32 %v979, %v980
          %v982 = vrot.slane %v981, 2
          %v983 = vadd.s32 %v981, %v982
          %v984 = vrot.slane %v983, 1
          %v985 = vadd.s32 %v983, %v984
          %s986 = vtos %v985
          %p987 = scmp.ge.s32.totalorder %s986, %s180
          %s988 = scalar_select %p987, %s959, %s958
          %s989 = sor.u32 %s988, 8
          %s990 = sshll.u32 %s989, 1
          %s991 = sxor.u32 %s990, 2147483648
          %v992 = vstv %s991
          %vm993 = vcmp.ge.s32.totalorder %v181, %v992
          %vm994 = vcmp.ge.s32.totalorder %v182, %v992
          %v995 = vsel %vm993, 1, 0
          %v996 = vsel %vm994, 1, 0
          %v997 = vadd.s32 %v995, %v996
          %v998 = vand.u32 %v997, 65535
          %v999 = vshrl.u32 %v997, 16
          %v1000 = vcvt.s32.f32 %v998
          %v1001 = vcvt.s32.f32 %v999
          %1002 = vadd.xlane.f32.xlu0 %v1000
          %v1003 = vpop.xlane.xlu0 %1002
          %1004 = vadd.xlane.f32.xlu0 %v1001
          %v1005 = vpop.xlane.xlu0 %1004
          %v1006 = vcvt.f32.s32 %v1003
          %v1007 = vcvt.f32.s32 %v1005
          %v1008 = vshll.u32 %v1007, 16
          %v1009 = vadd.s32 %v1008, %v1006
          %v1010 = vrot.slane %v1009, 4
          %v1011 = vadd.s32 %v1009, %v1010
          %v1012 = vrot.slane %v1011, 2
          %v1013 = vadd.s32 %v1011, %v1012
          %v1014 = vrot.slane %v1013, 1
          %v1015 = vadd.s32 %v1013, %v1014
          %s1016 = vtos %v1015
          %p1017 = scmp.ge.s32.totalorder %s1016, %s180
          %s1018 = scalar_select %p1017, %s989, %s988
          %s1019 = sor.u32 %s1018, 4
          %s1020 = sshll.u32 %s1019, 1
          %s1021 = sxor.u32 %s1020, 2147483648
          %v1022 = vstv %s1021
          %vm1023 = vcmp.ge.s32.totalorder %v181, %v1022
          %vm1024 = vcmp.ge.s32.totalorder %v182, %v1022
          %v1025 = vsel %vm1023, 1, 0
          %v1026 = vsel %vm1024, 1, 0
          %v1027 = vadd.s32 %v1025, %v1026
          %v1028 = vand.u32 %v1027, 65535
          %v1029 = vshrl.u32 %v1027, 16
          %v1030 = vcvt.s32.f32 %v1028
          %v1031 = vcvt.s32.f32 %v1029
          %1032 = vadd.xlane.f32.xlu0 %v1030
          %v1033 = vpop.xlane.xlu0 %1032
          %1034 = vadd.xlane.f32.xlu0 %v1031
          %v1035 = vpop.xlane.xlu0 %1034
          %v1036 = vcvt.f32.s32 %v1033
          %v1037 = vcvt.f32.s32 %v1035
          %v1038 = vshll.u32 %v1037, 16
          %v1039 = vadd.s32 %v1038, %v1036
          %v1040 = vrot.slane %v1039, 4
          %v1041 = vadd.s32 %v1039, %v1040
          %v1042 = vrot.slane %v1041, 2
          %v1043 = vadd.s32 %v1041, %v1042
          %v1044 = vrot.slane %v1043, 1
          %v1045 = vadd.s32 %v1043, %v1044
          %s1046 = vtos %v1045
          %p1047 = scmp.ge.s32.totalorder %s1046, %s180
          %s1048 = scalar_select %p1047, %s1019, %s1018
          %s1049 = sor.u32 %s1048, 2
          %s1050 = sshll.u32 %s1049, 1
          %s1051 = sxor.u32 %s1050, 2147483648
          %v1052 = vstv %s1051
          %vm1053 = vcmp.ge.s32.totalorder %v181, %v1052
          %vm1054 = vcmp.ge.s32.totalorder %v182, %v1052
          %v1055 = vsel %vm1053, 1, 0
          %v1056 = vsel %vm1054, 1, 0
          %v1057 = vadd.s32 %v1055, %v1056
          %v1058 = vand.u32 %v1057, 65535
          %v1059 = vshrl.u32 %v1057, 16
          %v1060 = vcvt.s32.f32 %v1058
          %v1061 = vcvt.s32.f32 %v1059
          %1062 = vadd.xlane.f32.xlu0 %v1060
          %v1063 = vpop.xlane.xlu0 %1062
          %1064 = vadd.xlane.f32.xlu0 %v1061
          %v1065 = vpop.xlane.xlu0 %1064
          %v1066 = vcvt.f32.s32 %v1063
          %v1067 = vcvt.f32.s32 %v1065
          %v1068 = vshll.u32 %v1067, 16
          %v1069 = vadd.s32 %v1068, %v1066
          %v1070 = vrot.slane %v1069, 4
          %v1071 = vadd.s32 %v1069, %v1070
          %v1072 = vrot.slane %v1071, 2
          %v1073 = vadd.s32 %v1071, %v1072
          %v1074 = vrot.slane %v1073, 1
          %v1075 = vadd.s32 %v1073, %v1074
          %s1076 = vtos %v1075
          %p1077 = scmp.ge.s32.totalorder %s1076, %s180
          %s1078 = scalar_select %p1077, %s1049, %s1048
          %s1079 = sor.u32 %s1078, 1
          %s1080 = sshll.u32 %s1079, 1
          %s1081 = sxor.u32 %s1080, 2147483648
          %v1082 = vstv %s1081
          %vm1083 = vcmp.ge.s32.totalorder %v181, %v1082
          %vm1084 = vcmp.ge.s32.totalorder %v182, %v1082
          %v1085 = vsel %vm1083, 1, 0
          %v1086 = vsel %vm1084, 1, 0
          %v1087 = vadd.s32 %v1085, %v1086
          %v1088 = vand.u32 %v1087, 65535
          %v1089 = vshrl.u32 %v1087, 16
          %v1090 = vcvt.s32.f32 %v1088
          %v1091 = vcvt.s32.f32 %v1089
          %1092 = vadd.xlane.f32.xlu0 %v1090
          %v1093 = vpop.xlane.xlu0 %1092
          %1094 = vadd.xlane.f32.xlu0 %v1091
          %v1095 = vpop.xlane.xlu0 %1094
          %v1096 = vcvt.f32.s32 %v1093
          %v1097 = vcvt.f32.s32 %v1095
          %v1098 = vshll.u32 %v1097, 16
          %v1099 = vadd.s32 %v1098, %v1096
          %v1100 = vrot.slane %v1099, 4
          %v1101 = vadd.s32 %v1099, %v1100
          %v1102 = vrot.slane %v1101, 2
          %v1103 = vadd.s32 %v1101, %v1102
          %v1104 = vrot.slane %v1103, 1
          %v1105 = vadd.s32 %v1103, %v1104
          %s1106 = vtos %v1105
          %p1107 = scmp.ge.s32.totalorder %s1106, %s180
          %s1108 = scalar_select %p1107, %s1079, %s1078
          %s1109 = sshll.u32 %s1108, 1
          %s1110 = sxor.u32 %s1109, 2147483648
          %s1111 = scalar_lea.smem [#allocation3], 0
          %1112 = sst [smem:[%s1111]] %s1110
        $region36: #{tpu_custom_call.1} parent=23 // pred_fallthru
          _
        %p1113 = scmp.ge.s32.totalorder %s20, 1
        // Predicated region
        $region37: #{tpu_custom_call.1} parent=23 // pred_check
          %p1114 = pneg %p1113
        $region38: #{tpu_custom_call.1} parent=23 // pred_check_branch
          %1116 = sbr.rel (%p1114) target = $region40
        $region39: #{tpu_custom_call.1} parent=23 // pred_region
          %v1117 = vld [vmem:[#allocation2] sm:$0xff]
          %v1118 = vld [vmem:[#allocation2 + $0x8] sm:$0xff]
          %v1119 = vxor.u32 %v1117, 2147483648
          %v1120 = vxor.u32 %v1118, 2147483648
          %v1121 = vshra.s32 %v1119, 1
          %v1122 = vshra.s32 %v1120, 1
          %v1123 = vand.u32 %v1121, 2147483647
          %v1124 = vand.u32 %v1122, 2147483647
          %v1125 = vshll.u32 %v1119, 31
          %v1126 = vshll.u32 %v1120, 31
          %v1127 = vor.u32 %v1123, %v1125
          %v1128 = vor.u32 %v1124, %v1126
          %s1131 = sld [smem:[#allocation3]]
          %v1132 = vstv %s1131
          %vm1133 = vcmp.ge.s32.totalorder %v1117, %v1132
          %vm1134 = vcmp.ge.s32.totalorder %v1118, %v1132
          %v1135 = vsel %vm1133, %v1127, 0.0
          %v1136 = vsel %vm1134, %v1128, 0.0
          %1137 = vst [vmem:[%s148] sm:$0xff] %v1135
          %1138 = vst [vmem:[%s148 + $0x8] sm:$0xff] %v1136
        $region40: #{tpu_custom_call.1} parent=23 // pred_fallthru
          _
        %s1139 = sand.u32 %s64, 1
        %s1140 = scalar_lea.sflag [#allocation8], %s1139
        %s1141 = sand.u32 %s64, 1
        %s1142 = smul.addr %s1141, 16
        %s1143 = scalar_lea.vmem [#allocation9], %s1142
        // Predicated region
        $region41: #{tpu_custom_call.1} parent=23 // pred_check
          %p1144 = pneg %p74
        $region42: #{tpu_custom_call.1} parent=23 // pred_check_branch
          %1146 = sbr.rel (%p1144) target = $region44
        $region43: #{tpu_custom_call.1} parent=23 // pred_region
          %s1147 = ssub.s32 %s20, 1
          %p1148 = scmp.gt.s32.totalorder %s1147, 0
          %s1149 = scalar_select %p1148, %s1147, 0
          %s1150 = smul.u32 2, %s1149
          %s1152 = ssub.s32 256, 256
          %1153 = vsyncadd %s1140, %s1152
          %s1154 = smul.addr %s1150, 128
          %s1155 = scalar_lea.hbm %s2, %s1154
          %s1156 = sshll.u32 %s1143, 4
          %s1157 = int_to_ptr.vmem [resolvable:$true] %s1156
          %1162 = dma.vmem_to_hbm [thread:$0]  %s1157, 256, %s1155, %s1140, 128, 128, 8
        $region44: #{tpu_custom_call.1} parent=23 // pred_fallthru
          _
      $region24: #{tpu_custom_call.1} parent=5 // pred_fallthru
        _
      %p1163 = scmp.le.s32.totalorder 2, %s15
      // Predicated region
      $region45: #{tpu_custom_call.1} parent=5 // pred_check
        %p1164 = pneg %p1163
      $region46: #{tpu_custom_call.1} parent=5 // pred_check_branch
        %1166 = sbr.rel (%p1164) target = $region48
      $region47: #{tpu_custom_call.1} parent=5 // pred_region
        %s1167 = ssub.s32 %s15, 2
        // Predicated region
        $region49: #{tpu_custom_call.1} parent=47 // pred_check
          %p1168 = pneg %p80
        $region50: #{tpu_custom_call.1} parent=47 // pred_check_branch
          %1170 = sbr.rel (%p1168) target = $region52
        $region51: #{tpu_custom_call.1} parent=47 // pred_region
          %s1171 = sand.u32 %s65, 1
          %s1172 = scalar_lea.sflag [#allocation8], %s1171
          %s1173 = sand.u32 %s65, 1
          %s1174 = smul.addr %s1173, 16
          %s1175 = scalar_lea.vmem [#allocation9], %s1174
          %1176 = dma.done %s1172, 256
        $region52: #{tpu_custom_call.1} parent=47 // pred_fallthru
          _
      $region48: #{tpu_custom_call.1} parent=5 // pred_fallthru
        _
    $region6: #{tpu_custom_call.1} parent=1 // loop_footer
      %s19 = sadd.s32 1, %s15
    $region7: #{tpu_custom_call.1} parent=1 // loop_footer_branch
      %14 = sbr.rel target = $region3
    $region8: #{tpu_custom_call.1} parent=1 // loop_exit
      _
    %1177 = vsyncpa [#allocation7], 1
    %s1178 = scalar_lea.sflag [#allocation7], 1
    %1179 = vsyncpa %s1178, 1
    %1180 = vsyncpa [#allocation8], 1
    %s1181 = scalar_lea.sflag [#allocation8], 1
    %1182 = vsyncpa %s1181, 1

</llo_original>
